<compile_context>
chip_gen: v7x
topology: tpu7x:2x2x1
jax: 0.10.0
libtpu: 0.0.40
codegen_flags: <defaults>
</compile_context>

<pallas_src>
import jax
import jax.numpy as jnp
from jax.experimental import pallas as pl
from jax.experimental.pallas import tpu as pltpu


# ---------------------------------------------------------------------------
# In-kernel helpers (transposed layout: points on the lane axis)
# ---------------------------------------------------------------------------
def _mlp_t(x_ref, w1_ref, b1_ref, w2_ref, b2_ref):
    """W1^T @ x + b1 -> ReLU -> W2^T @ h + b2.

    x: (C, tile_n) bf16, w1: (H, C) bf16, b1: (H, 1) f32,
    w2: (K, H) bf16, b2: (K, 1) f32.  Returns (K, tile_n) f32 logits.
    """
    h = jnp.dot(w1_ref[...], x_ref[...], preferred_element_type=jnp.float32)
    h = jnp.maximum(h + b1_ref[...], 0.0)
    logits = jnp.dot(w2_ref[...], h.astype(w2_ref.dtype),
                     preferred_element_type=jnp.float32) + b2_ref[...]
    return logits


def _ce_partial_t(logits, seg_ref):
    """Per-tile CE partial sum / valid count in the transposed layout.

    logits: (K, tile_n) f32, seg: (1, tile_n) int32. ignore_index=-1 (also
    masks host-side padding).  Reductions over the small sublane class axis.
    """
    seg = seg_ref[...]                                         # (1, tile_n)
    valid = seg >= 0
    m = jnp.max(logits, axis=0, keepdims=True)                 # (1, tile_n)
    lse = jnp.log(jnp.sum(jnp.exp(logits - m), axis=0, keepdims=True)) + m
    cls = jax.lax.broadcasted_iota(jnp.int32, logits.shape, 0)  # class idx (sublane)
    tgt = jnp.sum(jnp.where(cls == seg, logits, 0.0), axis=0, keepdims=True)
    nll = jnp.where(valid, lse - tgt, 0.0)                      # (1, tile_n)
    loss_sum = jnp.sum(nll, axis=-1, keepdims=True)             # (1, 1)
    count = jnp.sum(valid.astype(jnp.float32), axis=-1, keepdims=True)
    return loss_sum, count


def _pack_partials(part_ref, loss_sum, count):
    """Pack (loss_sum, count) into one (1, 1, 2) output block."""
    lane = jax.lax.broadcasted_iota(jnp.int32, (1, 1, 2), 2)
    part_ref[...] = jnp.where(lane == 0,
                              loss_sum.reshape(1, 1, 1),
                              count.reshape(1, 1, 1))


# ---------------------------------------------------------------------------
# Kernels
# ---------------------------------------------------------------------------
def _backbone_kernel(x_ref, w1_ref, b1_ref, w2_ref, b2_ref, o_ref):
    o_ref[...] = _mlp_t(x_ref, w1_ref, b1_ref, w2_ref, b2_ref).astype(o_ref.dtype)


def _fused_train_kernel(x_ref, seg_ref, w1_ref, b1_ref, w2_ref, b2_ref, part_ref):
    logits = _mlp_t(x_ref, w1_ref, b1_ref, w2_ref, b2_ref)
    loss_sum, count = _ce_partial_t(logits, seg_ref)
    _pack_partials(part_ref, loss_sum, count)


def _fused_eval_kernel(x_ref, seg_ref, w1_ref, b1_ref, w2_ref, b2_ref,
                       part_ref, o_ref):
    logits = _mlp_t(x_ref, w1_ref, b1_ref, w2_ref, b2_ref)
    o_ref[...] = logits.astype(o_ref.dtype)          # lane-dense bf16 store
    loss_sum, count = _ce_partial_t(logits, seg_ref)
    _pack_partials(part_ref, loss_sum, count)


# ---------------------------------------------------------------------------
# Host-side wrappers
# ---------------------------------------------------------------------------
def _round_up(n, m):
    return -(-n // m) * m


def _pick_tile(n, max_tile, align=512, min_tiles=2):
    """Lane-axis tile size: large enough to amortize per-step overhead, small
    enough to give >= min_tiles tiles for v7x's 2 TensorCores."""
    if n <= align:
        return align
    t = _round_up(-(-n // min_tiles), align)
    return max(align, min(t, max_tile))


def _prep_params(params, compute_dtype):
    w1, b1, w2, b2 = params
    # Transposed weights so points sit on the lane axis inside the kernel.
    return (jnp.transpose(w1).astype(compute_dtype),          # (H, C)
            jnp.reshape(b1, (-1, 1)).astype(jnp.float32),     # (H, 1)
            jnp.transpose(w2).astype(compute_dtype),          # (K, H)
            jnp.reshape(b2, (-1, 1)).astype(jnp.float32))     # (K, 1)


def _prep_feat(feat, tile_n, compute_dtype):
    # TODO(synk): upstream can hand feat directly as (C, N) bf16 to skip this pass.
    n = feat.shape[0]
    n_pad = _round_up(n, tile_n)
    x_t = jnp.transpose(feat).astype(compute_dtype)           # (C, N)
    if n_pad != n:
        x_t = jnp.pad(x_t, ((0, 0), (0, n_pad - n)))
    return x_t, n_pad


def _prep_seg(segment, n_pad):
    n = segment.shape[0]
    seg = segment.astype(jnp.int32).reshape(1, -1)            # lane-dense (1, N)
    if n_pad != n:
        seg = jnp.pad(seg, ((0, 0), (0, n_pad - n)), constant_values=-1)
    return seg


def backbone_forward(feat, params, *, max_tile_n=4096, compute_dtype=jnp.bfloat16):
    """Inference-only path: per-point logits (N, K) f32."""
    N, C = feat.shape
    w1t, b1c, w2t, b2c = _prep_params(params, compute_dtype)
    H, K = w1t.shape[0], w2t.shape[0]
    tile_n = _pick_tile(N, max_tile_n)
    x_t, Np = _prep_feat(feat, tile_n, compute_dtype)
    num_tiles = Np // tile_n

    logits_t = pl.pallas_call(
        _backbone_kernel,
        out_shape=jax.ShapeDtypeStruct((K, Np), jnp.bfloat16),
        grid_spec=pltpu.PrefetchScalarGridSpec(
            num_scalar_prefetch=0,
            grid=(num_tiles,),
            in_specs=[
                pl.BlockSpec((C, tile_n), lambda i: (0, i)),
                pl.BlockSpec((H, C), lambda i: (0, 0)),
                pl.BlockSpec((H, 1), lambda i: (0, 0)),
                pl.BlockSpec((K, H), lambda i: (0, 0)),
                pl.BlockSpec((K, 1), lambda i: (0, 0)),
            ],
            out_specs=pl.BlockSpec((K, tile_n), lambda i: (0, i)),
        ),
        compiler_params=pltpu.CompilerParams(dimension_semantics=("parallel",)),
    )(x_t, w1t, b1c, w2t, b2c)
    # Back to the module's per-point (N, K) layout (output plumbing only).
    return jnp.transpose(logits_t[:, :N]).astype(jnp.float32)


def fused_forward_loss(feat, segment, params, *, max_tile_n=4096,
                       compute_dtype=jnp.bfloat16, return_logits=False):
    """Fused backbone + cross-entropy.  Returns loss (and logits if requested)."""
    N, C = feat.shape
    w1t, b1c, w2t, b2c = _prep_params(params, compute_dtype)
    H, K = w1t.shape[0], w2t.shape[0]
    tile_n = _pick_tile(N, max_tile_n)
    x_t, Np = _prep_feat(feat, tile_n, compute_dtype)
    seg = _prep_seg(segment, Np)
    num_tiles = Np // tile_n

    out_shapes = [jax.ShapeDtypeStruct((num_tiles, 1, 2), jnp.float32)]
    out_specs = [pl.BlockSpec((1, 1, 2), lambda i: (i, 0, 0))]
    if return_logits:
        out_shapes.append(jax.ShapeDtypeStruct((K, Np), jnp.bfloat16))
        out_specs.append(pl.BlockSpec((K, tile_n), lambda i: (0, i)))
        kernel = _fused_eval_kernel
    else:
        kernel = _fused_train_kernel

    outs = pl.pallas_call(
        kernel,
        out_shape=tuple(out_shapes),
        grid_spec=pltpu.PrefetchScalarGridSpec(
            num_scalar_prefetch=0,
            grid=(num_tiles,),
            in_specs=[
                pl.BlockSpec((C, tile_n), lambda i: (0, i)),
                pl.BlockSpec((1, tile_n), lambda i: (0, i)),
                pl.BlockSpec((H, C), lambda i: (0, 0)),
                pl.BlockSpec((H, 1), lambda i: (0, 0)),
                pl.BlockSpec((K, H), lambda i: (0, 0)),
                pl.BlockSpec((K, 1), lambda i: (0, 0)),
            ],
            out_specs=tuple(out_specs),
        ),
        compiler_params=pltpu.CompilerParams(dimension_semantics=("parallel",)),
    )(x_t, seg, w1t, b1c, w2t, b2c)

    partials = outs[0]                                   # (num_tiles, 1, 2)
    loss_sum = jnp.sum(partials[..., 0])
    n_valid = jnp.sum(partials[..., 1])
    loss = loss_sum / jnp.maximum(n_valid, 1.0)
    if return_logits:
        seg_logits = jnp.transpose(outs[1][:, :N]).astype(jnp.float32)
        return loss, seg_logits
    return loss


# ---------------------------------------------------------------------------
# DefaultSegmentor.forward equivalent
# ---------------------------------------------------------------------------
def default_segmentor_forward(params, input_dict, training=False):
    input_dict = dict(input_dict)
    if "condition" in input_dict:
        input_dict["condition"] = input_dict["condition"][0]   # pure glue

    feat = input_dict["feat"]
    if training:
        loss = fused_forward_loss(feat, input_dict["segment"], params,
                                  return_logits=False)
        return dict(loss=loss)
    elif "segment" in input_dict:
        loss, seg_logits = fused_forward_loss(feat, input_dict["segment"], params,
                                              return_logits=True)
        return dict(loss=loss, seg_logits=seg_logits)
    else:
        return dict(seg_logits=backbone_forward(feat, params))


if __name__ == "__main__":
    # Small, forward-consistent shapes: N points, C in-features, H hidden, K classes.
    # N is deliberately NOT a multiple of the tile size to exercise padding/masking.
    N, C, H, K = 2500, 8, 64, 16

    key = jax.random.PRNGKey(0)
    k_feat, k_seg, k_ign, k_w1, k_b1, k_w2, k_b2 = jax.random.split(key, 7)

    feat = jax.random.normal(k_feat, (N, C), dtype=jnp.float32)
    labels = jax.random.randint(k_seg, (N,), 0, K, dtype=jnp.int32)
    ignore = jax.random.uniform(k_ign, (N,)) < 0.1          # ~10% ignore_index=-1
    segment = jnp.where(ignore, -1, labels).astype(jnp.int32)

    # Deterministic synthetic parameter init (no checkpoint loading).
    w1 = jax.random.normal(k_w1, (C, H), dtype=jnp.float32) * 0.1
    b1 = jax.random.normal(k_b1, (1, H), dtype=jnp.float32) * 0.01
    w2 = jax.random.normal(k_w2, (H, K), dtype=jnp.float32) * 0.1
    b2 = jax.random.normal(k_b2, (1, K), dtype=jnp.float32) * 0.01
    params = (w1, b1, w2, b2)

    input_dict = {
        "feat": feat,
        "segment": segment,
        "condition": ["ScanNet"],  # exercises the condition[0] branch (pure glue)
    }

    # eval-with-labels path (loss + seg_logits)
    out_eval = default_segmentor_forward(params, input_dict, training=False)
    jax.block_until_ready(out_eval["seg_logits"])
    jax.block_until_ready(out_eval["loss"])

    # training path (loss only; fused kernel, logits never leave vregs)
    out_train = default_segmentor_forward(params, input_dict, training=True)
    jax.block_until_ready(out_train["loss"])

    # inference path (logits only)
    out_inf = default_segmentor_forward(params, {"feat": feat}, training=False)
    jax.block_until_ready(out_inf["seg_logits"])

    # Plain-JAX f32 reference (kernel uses bf16 MXU inputs / bf16 logit store
    # -> relaxed tolerance).
    ref_h = jnp.maximum(feat @ w1 + b1, 0.0)
    ref_logits = ref_h @ w2 + b2
    valid = segment >= 0
    safe = jnp.where(valid, segment, 0)
    ref_nll = (jax.nn.logsumexp(ref_logits, axis=-1)
               - jnp.take_along_axis(ref_logits, safe[:, None], axis=-1)[:, 0])
    ref_loss = jnp.sum(jnp.where(valid, ref_nll, 0.0)) / jnp.sum(valid)

    assert jnp.allclose(out_eval["seg_logits"], ref_logits, atol=2e-2), "eval logits mismatch"
    assert jnp.allclose(out_inf["seg_logits"], ref_logits, atol=2e-2), "inference logits mismatch"
    assert jnp.allclose(out_eval["loss"], ref_loss, atol=1e-2), "eval loss mismatch"
    assert jnp.allclose(out_train["loss"], ref_loss, atol=1e-2), "train loss mismatch"

    print("KERNEL_OK")
</pallas_src>

<mosaic_0001>
module attributes {stable_mosaic.version = 11 : i64} {
  func.func @_fused_eval_kernel(%arg0: i32, %arg1: memref<8x1536xbf16, #tpu.memory_space<vmem>>, %arg2: memref<1x1536xi32, #tpu.memory_space<vmem>>, %arg3: memref<64x8xbf16, #tpu.memory_space<vmem>>, %arg4: memref<64x1xf32, #tpu.memory_space<vmem>>, %arg5: memref<16x64xbf16, #tpu.memory_space<vmem>>, %arg6: memref<16x1xf32, #tpu.memory_space<vmem>>, %arg7: memref<1x1x2xf32, #tpu.memory_space<vmem>>, %arg8: memref<16x1536xbf16, #tpu.memory_space<vmem>>) attributes {dimension_semantics = [#tpu.dimension_semantics<parallel>], iteration_bounds = array<i64: 2>, scalar_prefetch = 0 : i64, scratch_operands = 0 : i64, tpu.core_type = #tpu.core_type<tc>, window_params = [{transform_indices = @transform_0, window_bounds = array<i64: 8, 1536>}, {transform_indices = @transform_1, window_bounds = array<i64: 1, 1536>}, {pipeline_mode = #tpu.pipeline_mode<synchronous>, transform_indices = @transform_2, window_bounds = array<i64: 64, 8>}, {pipeline_mode = #tpu.pipeline_mode<synchronous>, transform_indices = @transform_3, window_bounds = array<i64: 64, 1>}, {pipeline_mode = #tpu.pipeline_mode<synchronous>, transform_indices = @transform_4, window_bounds = array<i64: 16, 64>}, {pipeline_mode = #tpu.pipeline_mode<synchronous>, transform_indices = @transform_5, window_bounds = array<i64: 16, 1>}, {transform_indices = @transform_6, window_bounds = array<i64: 1, 1, 2>}, {transform_indices = @transform_7, window_bounds = array<i64: 16, 1536>}]} {
    %c0 = arith.constant 0 : index
    %c0_0 = arith.constant 0 : index
    %0 = vector.load %arg3[%c0, %c0_0] : memref<64x8xbf16, #tpu.memory_space<vmem>>, vector<64x8xbf16>
    %c0_1 = arith.constant 0 : index
    %c0_2 = arith.constant 0 : index
    %1 = vector.load %arg1[%c0_1, %c0_2] : memref<8x1536xbf16, #tpu.memory_space<vmem>>, vector<8x1536xbf16>
    %cst = arith.constant dense<0.000000e+00> : vector<64x1536xf32>
    %2 = tpu.matmul %0, %1, %cst {dimension_numbers = #tpu.dot_dimension_numbers<[1], [0], [0], [1], [0, 0, 1, 1], [], []>} : vector<64x8xbf16>, vector<8x1536xbf16>, vector<64x1536xf32> -> vector<64x1536xf32>
    %c0_3 = arith.constant 0 : index
    %c0_4 = arith.constant 0 : index
    %3 = vector.load %arg4[%c0_3, %c0_4] : memref<64x1xf32, #tpu.memory_space<vmem>>, vector<64x1xf32>
    %4 = vector.broadcast %3 : vector<64x1xf32> to vector<64x1536xf32>
    %5 = arith.addf %2, %4 : vector<64x1536xf32>
    %cst_5 = arith.constant 0.000000e+00 : f32
    %6 = vector.broadcast %cst_5 : f32 to vector<64x1536xf32>
    %7 = arith.maximumf %5, %6 : vector<64x1536xf32>
    %c0_6 = arith.constant 0 : index
    %c0_7 = arith.constant 0 : index
    %8 = vector.load %arg5[%c0_6, %c0_7] : memref<16x64xbf16, #tpu.memory_space<vmem>>, vector<16x64xbf16>
    %9 = arith.truncf %7 : vector<64x1536xf32> to vector<64x1536xbf16>
    %cst_8 = arith.constant dense<0.000000e+00> : vector<16x1536xf32>
    %10 = tpu.matmul %8, %9, %cst_8 {dimension_numbers = #tpu.dot_dimension_numbers<[1], [0], [0], [1], [0, 0, 1, 1], [], []>} : vector<16x64xbf16>, vector<64x1536xbf16>, vector<16x1536xf32> -> vector<16x1536xf32>
    %c0_9 = arith.constant 0 : index
    %c0_10 = arith.constant 0 : index
    %11 = vector.load %arg6[%c0_9, %c0_10] : memref<16x1xf32, #tpu.memory_space<vmem>>, vector<16x1xf32>
    %12 = vector.broadcast %11 : vector<16x1xf32> to vector<16x1536xf32>
    %13 = arith.addf %10, %12 : vector<16x1536xf32>
    %14 = arith.truncf %13 : vector<16x1536xf32> to vector<16x1536xbf16>
    %c0_11 = arith.constant 0 : index
    %c0_12 = arith.constant 0 : index
    %15 = vector.load %arg8[%c0_11, %c0_12] : memref<16x1536xbf16, #tpu.memory_space<vmem>>, vector<16x1536xbf16>
    tpu.vector_store %arg8[%c0_11, %c0_12], %14 {strides = array<i32>} : memref<16x1536xbf16, #tpu.memory_space<vmem>>, vector<16x1536xbf16>,
    %c0_13 = arith.constant 0 : index
    %c0_14 = arith.constant 0 : index
    %16 = vector.load %arg2[%c0_13, %c0_14] : memref<1x1536xi32, #tpu.memory_space<vmem>>, vector<1x1536xi32>
    %c0_i32 = arith.constant 0 : i32
    %17 = vector.broadcast %c0_i32 : i32 to vector<1x1536xi32>
    %18 = arith.cmpi sge, %16, %17 : vector<1x1536xi32>
    %cst_15 = arith.constant dense<0xFF800000> : vector<1536xf32>
    %19 = vector.multi_reduction <maximumf>, %13, %cst_15 [0] : vector<16x1536xf32> to vector<1536xf32>
    %20 = vector.shape_cast %19 : vector<1536xf32> to vector<1x1536xf32>
    %21 = vector.broadcast %20 : vector<1x1536xf32> to vector<16x1536xf32>
    %22 = arith.subf %13, %21 : vector<16x1536xf32>
    %23 = math.exp %22 : vector<16x1536xf32>
    %cst_16 = arith.constant dense<0.000000e+00> : vector<1536xf32>
    %24 = vector.multi_reduction <add>, %23, %cst_16 [0] : vector<16x1536xf32> to vector<1536xf32>
    %25 = vector.shape_cast %24 : vector<1536xf32> to vector<1x1536xf32>
    %26 = math.log %25 : vector<1x1536xf32>
    %27 = arith.addf %26, %20 : vector<1x1536xf32>
    %28 = tpu.iota {dimensions = array<i32: 0>} : vector<16x1536xi32>
    %29 = vector.broadcast %16 : vector<1x1536xi32> to vector<16x1536xi32>
    %30 = arith.cmpi eq, %28, %29 : vector<16x1536xi32>
    %cst_17 = arith.constant 0.000000e+00 : f32
    %31 = vector.broadcast %cst_17 : f32 to vector<16x1536xf32>
    %32 = arith.select %30, %13, %31 : vector<16x1536xi1>, vector<16x1536xf32>
    %cst_18 = arith.constant dense<0.000000e+00> : vector<1536xf32>
    %33 = vector.multi_reduction <add>, %32, %cst_18 [0] : vector<16x1536xf32> to vector<1536xf32>
    %34 = vector.shape_cast %33 : vector<1536xf32> to vector<1x1536xf32>
    %35 = arith.subf %27, %34 : vector<1x1536xf32>
    %cst_19 = arith.constant 0.000000e+00 : f32
    %36 = vector.broadcast %cst_19 : f32 to vector<1x1536xf32>
    %37 = arith.select %18, %35, %36 : vector<1x1536xi1>, vector<1x1536xf32>
    %cst_20 = arith.constant dense<0.000000e+00> : vector<1xf32>
    %38 = vector.multi_reduction <add>, %37, %cst_20 [1] : vector<1x1536xf32> to vector<1xf32>
    %39 = vector.shape_cast %38 : vector<1xf32> to vector<1x1xf32>
    %40 = arith.extui %18 : vector<1x1536xi1> to vector<1x1536xi32>
    %41 = arith.sitofp %40 : vector<1x1536xi32> to vector<1x1536xf32>
    %cst_21 = arith.constant dense<0.000000e+00> : vector<1xf32>
    %42 = vector.multi_reduction <add>, %41, %cst_21 [1] : vector<1x1536xf32> to vector<1xf32>
    %43 = vector.shape_cast %42 : vector<1xf32> to vector<1x1xf32>
    %44 = tpu.iota {dimensions = array<i32: 2>} : vector<1x1x2xi32>
    %c0_i32_22 = arith.constant 0 : i32
    %45 = vector.broadcast %c0_i32_22 : i32 to vector<1x1x2xi32>
    %46 = arith.cmpi eq, %44, %45 : vector<1x1x2xi32>
    %47 = vector.shape_cast %39 : vector<1x1xf32> to vector<1x1x1xf32>
    %48 = vector.shape_cast %43 : vector<1x1xf32> to vector<1x1x1xf32>
    %49 = vector.shape_cast %47 : vector<1x1x1xf32> to vector<1x1x1xf32>
    %50 = vector.broadcast %49 : vector<1x1x1xf32> to vector<1x1x2xf32>
    %51 = vector.shape_cast %48 : vector<1x1x1xf32> to vector<1x1x1xf32>
    %52 = vector.broadcast %51 : vector<1x1x1xf32> to vector<1x1x2xf32>
    %53 = arith.select %46, %50, %52 : vector<1x1x2xi1>, vector<1x1x2xf32>
    %c0_23 = arith.constant 0 : index
    %c0_24 = arith.constant 0 : index
    %c0_25 = arith.constant 0 : index
    %54 = vector.load %arg7[%c0_23, %c0_24, %c0_25] : memref<1x1x2xf32, #tpu.memory_space<vmem>>, vector<1x1x2xf32>
    tpu.vector_store %arg7[%c0_23, %c0_24, %c0_25], %53 {strides = array<i32>} : memref<1x1x2xf32, #tpu.memory_space<vmem>>, vector<1x1x2xf32>,
    return
  }
  func.func @transform_0(%arg0: i32) -> (i32, i32) {
    %c0_i32 = arith.constant 0 : i32
    %c0_i32_0 = arith.constant 0 : i32
    return %c0_i32, %arg0 : i32, i32
  }
  func.func @transform_1(%arg0: i32) -> (i32, i32) {
    %c0_i32 = arith.constant 0 : i32
    %c0_i32_0 = arith.constant 0 : i32
    return %c0_i32, %arg0 : i32, i32
  }
  func.func @transform_2(%arg0: i32) -> (i32, i32) {
    %c0_i32 = arith.constant 0 : i32
    %c0_i32_0 = arith.constant 0 : i32
    %c0_i32_1 = arith.constant 0 : i32
    return %c0_i32, %c0_i32_0 : i32, i32
  }
  func.func @transform_3(%arg0: i32) -> (i32, i32) {
    %c0_i32 = arith.constant 0 : i32
    %c0_i32_0 = arith.constant 0 : i32
    %c0_i32_1 = arith.constant 0 : i32
    return %c0_i32, %c0_i32_0 : i32, i32
  }
  func.func @transform_4(%arg0: i32) -> (i32, i32) {
    %c0_i32 = arith.constant 0 : i32
    %c0_i32_0 = arith.constant 0 : i32
    %c0_i32_1 = arith.constant 0 : i32
    return %c0_i32, %c0_i32_0 : i32, i32
  }
  func.func @transform_5(%arg0: i32) -> (i32, i32) {
    %c0_i32 = arith.constant 0 : i32
    %c0_i32_0 = arith.constant 0 : i32
    %c0_i32_1 = arith.constant 0 : i32
    return %c0_i32, %c0_i32_0 : i32, i32
  }
  func.func @transform_6(%arg0: i32) -> (i32, i32, i32) {
    %c0_i32 = arith.constant 0 : i32
    %c0_i32_0 = arith.constant 0 : i32
    %c0_i32_1 = arith.constant 0 : i32
    return %arg0, %c0_i32, %c0_i32_0 : i32, i32, i32
  }
  func.func @transform_7(%arg0: i32) -> (i32, i32) {
    %c0_i32 = arith.constant 0 : i32
    %c0_i32_0 = arith.constant 0 : i32
    return %c0_i32, %arg0 : i32, i32
  }
}

</mosaic_0001>

<llo_original>
// kernel: tpu_custom_call.1
$region0: #{tpu_custom_call.1}
  #allocation0 [shape = 'u32[]', space=smem, size = 0x4, offset = 0x4, fixed_abs, tag = 'smem constant byte address 0x4 - core index']
  #allocation1 [shape = 'u32[144,128]{1,0:T(1,128)}', space=vmem, size = 0x12000, scoped, tag = 'internal scratch']
  %s0 = inlined_call_operand.vmem [shape: bf16[8,3072], index: 0, kind: input, shape index: {}]
  %s1 = inlined_call_operand.vmem [shape: s32[1,3072], index: 1, kind: input, shape index: {}]
  %s2 = inlined_call_operand.vmem [shape: bf16[64,8], index: 2, kind: input, shape index: {}]
  %s3 = inlined_call_operand.vmem [shape: f32[64,1], index: 3, kind: input, shape index: {}]
  %s4 = inlined_call_operand.vmem [shape: bf16[16,64], index: 4, kind: input, shape index: {}]
  %s5 = inlined_call_operand.vmem [shape: f32[16,1], index: 5, kind: input, shape index: {}]
  %s6 = inlined_call_operand.hbm [shape: f32[2,1,2], index: 6, kind: output, shape index: {0}]
  %s7 = inlined_call_operand.hbm [shape: bf16[16,3072], index: 7, kind: output, shape index: {1}]
  %8 = xla_tuple %s6, %s7
  %s9 = sld [smem:[#allocation0]]
  $region65: #{tpu_custom_call.1} parent=0
    _
  %s11 = ssub.s32 1, %s9
  %s12 = scalar_select 0, %s11, %s9
  $region1: #{tpu_custom_call.1} parent=0
    #allocation2 [shape = 'u8[1024]{0}', space=vmem, size = 0x400, scoped, tag = 'output window, operand 0']
    #allocation3 [shape = 's32[2]{0}', space=sflag, size = 0x8, scoped, tag = 'scoped memory for tpu_custom_call.1']
    #allocation4 [shape = 'u8[98304]{0}', space=vmem, size = 0x18000, scoped, tag = 'output window, operand 1']
    #allocation5 [shape = 's32[2]{0}', space=sflag, size = 0x8, scoped, tag = 'scoped memory for tpu_custom_call.1']
    %13 = vsyncpa [#allocation3], 0
    %s14 = scalar_lea.sflag [#allocation3], 1
    %15 = vsyncpa %s14, 0
    %16 = vsyncpa [#allocation5], 0
    %s17 = scalar_lea.sflag [#allocation5], 1
    %18 = vsyncpa %s17, 0
    loop: start=0, step=1, limit=4
    $region2: #{tpu_custom_call.1} parent=1 // loop_pre_header
      _
    $region3: #{tpu_custom_call.1} parent=1 // loop_header
      %s20 = sphi 0, %s24
      %p21 = scmp.ge.s32.totalorder %s20, 4
      %s30 = sphi 0, %s32
      %s33 = sphi 0, %s30
      %s34 = sphi 0, %s33
      %s50 = sphi 0, %s34
      %s56 = sphi 0, %s58
      %s59 = sphi 0, %s56
      %s60 = sphi 0, %s59
      %s76 = sphi 0, %s60
      %s80 = sphi 0, %s80
      %s82 = sphi 0, %s80
      %s83 = sphi 0, %s82
      %s97 = sphi 0, %s83
      %s101 = sphi 0, %s101
      %s103 = sphi 0, %s101
      %s104 = sphi 0, %s103
      %s118 = sphi 0, %s104
      %s122 = sphi 0, %s122
      %s124 = sphi 0, %s122
      %s125 = sphi 0, %s124
      %s139 = sphi 0, %s125
      %s143 = sphi 0, %s143
      %s145 = sphi 0, %s143
      %s146 = sphi 0, %s145
      %s160 = sphi 0, %s146
      %s166 = sphi 0, %s168
      %s169 = sphi 0, %s166
      %s170 = sphi 0, %s169
      %s186 = sphi 0, %s170
      %s192 = sphi 0, %s194
      %s195 = sphi 0, %s192
      %s196 = sphi 0, %s195
      %s212 = sphi 0, %s196
    $region4: #{tpu_custom_call.1} parent=1 // loop_header_branch
      %23 = sbr.rel (%p21) target = $region8
    $region5: #{tpu_custom_call.1} parent=1 // loop_body
      %s25 = ssub.s32 %s20, 1
      %s26 = ssub.s32 %s20, 2
      %s27 = sadd.s32 %s20, 1
      %s28 = ssub.s32 %s20, %s27
      %p29 = scmp.eq.s32.totalorder %s28, 0
      %s31 = sadd.s32 %s30, 1
      %s32 = scalar_select %p29, %s30, %s31
      %p35 = pneg %p29
      %p36 = scmp.eq.s32.totalorder %s20, 1
      %p37 = por %p35, %p36
      %p38 = scmp.ne.s32.totalorder %s30, %s33
      %p39 = scmp.eq.s32.totalorder %s20, 0
      %p40 = por %p38, %p39
      %p41 = scmp.ne.s32.totalorder %s30, %s33
      %p42 = scmp.eq.s32.totalorder %s25, 1
      %p43 = por %p41, %p42
      %p44 = scmp.ne.s32.totalorder %s33, %s34
      %p45 = scmp.eq.s32.totalorder %s25, 0
      %p46 = por %p44, %p45
      %p47 = scmp.ne.s32.totalorder %s33, %s34
      %p48 = scmp.eq.s32.totalorder %s26, 1
      %p49 = por %p47, %p48
      %p51 = scmp.ne.s32.totalorder %s34, %s50
      %p52 = scmp.eq.s32.totalorder %s26, 0
      %p53 = por %p51, %p52
      %s54 = ssub.s32 %s20, %s27
      %p55 = scmp.eq.s32.totalorder %s54, 0
      %s57 = sadd.s32 %s56, 1
      %s58 = scalar_select %p55, %s56, %s57
      %p61 = pneg %p55
      %p62 = scmp.eq.s32.totalorder %s20, 1
      %p63 = por %p61, %p62
      %p64 = scmp.ne.s32.totalorder %s56, %s59
      %p65 = scmp.eq.s32.totalorder %s20, 0
      %p66 = por %p64, %p65
      %p67 = scmp.ne.s32.totalorder %s56, %s59
      %p68 = scmp.eq.s32.totalorder %s25, 1
      %p69 = por %p67, %p68
      %p70 = scmp.ne.s32.totalorder %s59, %s60
      %p71 = scmp.eq.s32.totalorder %s25, 0
      %p72 = por %p70, %p71
      %p73 = scmp.ne.s32.totalorder %s59, %s60
      %p74 = scmp.eq.s32.totalorder %s26, 1
      %p75 = por %p73, %p74
      %p77 = scmp.ne.s32.totalorder %s60, %s76
      %p78 = scmp.eq.s32.totalorder %s26, 0
      %p79 = por %p77, %p78
      %s81 = sadd.s32 %s80, 1
      %p84 = scmp.eq.s32.totalorder %s20, 1
      %p85 = scmp.ne.s32.totalorder %s80, %s82
      %p86 = scmp.eq.s32.totalorder %s20, 0
      %p87 = por %p85, %p86
      %p88 = scmp.ne.s32.totalorder %s80, %s82
      %p89 = scmp.eq.s32.totalorder %s25, 1
      %p90 = por %p88, %p89
      %p91 = scmp.ne.s32.totalorder %s82, %s83
      %p92 = scmp.eq.s32.totalorder %s25, 0
      %p93 = por %p91, %p92
      %p94 = scmp.ne.s32.totalorder %s82, %s83
      %p95 = scmp.eq.s32.totalorder %s26, 1
      %p96 = por %p94, %p95
      %p98 = scmp.ne.s32.totalorder %s83, %s97
      %p99 = scmp.eq.s32.totalorder %s26, 0
      %p100 = por %p98, %p99
      %s102 = sadd.s32 %s101, 1
      %p105 = scmp.eq.s32.totalorder %s20, 1
      %p106 = scmp.ne.s32.totalorder %s101, %s103
      %p107 = scmp.eq.s32.totalorder %s20, 0
      %p108 = por %p106, %p107
      %p109 = scmp.ne.s32.totalorder %s101, %s103
      %p110 = scmp.eq.s32.totalorder %s25, 1
      %p111 = por %p109, %p110
      %p112 = scmp.ne.s32.totalorder %s103, %s104
      %p113 = scmp.eq.s32.totalorder %s25, 0
      %p114 = por %p112, %p113
      %p115 = scmp.ne.s32.totalorder %s103, %s104
      %p116 = scmp.eq.s32.totalorder %s26, 1
      %p117 = por %p115, %p116
      %p119 = scmp.ne.s32.totalorder %s104, %s118
      %p120 = scmp.eq.s32.totalorder %s26, 0
      %p121 = por %p119, %p120
      %s123 = sadd.s32 %s122, 1
      %p126 = scmp.eq.s32.totalorder %s20, 1
      %p127 = scmp.ne.s32.totalorder %s122, %s124
      %p128 = scmp.eq.s32.totalorder %s20, 0
      %p129 = por %p127, %p128
      %p130 = scmp.ne.s32.totalorder %s122, %s124
      %p131 = scmp.eq.s32.totalorder %s25, 1
      %p132 = por %p130, %p131
      %p133 = scmp.ne.s32.totalorder %s124, %s125
      %p134 = scmp.eq.s32.totalorder %s25, 0
      %p135 = por %p133, %p134
      %p136 = scmp.ne.s32.totalorder %s124, %s125
      %p137 = scmp.eq.s32.totalorder %s26, 1
      %p138 = por %p136, %p137
      %p140 = scmp.ne.s32.totalorder %s125, %s139
      %p141 = scmp.eq.s32.totalorder %s26, 0
      %p142 = por %p140, %p141
      %s144 = sadd.s32 %s143, 1
      %p147 = scmp.eq.s32.totalorder %s20, 1
      %p148 = scmp.ne.s32.totalorder %s143, %s145
      %p149 = scmp.eq.s32.totalorder %s20, 0
      %p150 = por %p148, %p149
      %p151 = scmp.ne.s32.totalorder %s143, %s145
      %p152 = scmp.eq.s32.totalorder %s25, 1
      %p153 = por %p151, %p152
      %p154 = scmp.ne.s32.totalorder %s145, %s146
      %p155 = scmp.eq.s32.totalorder %s25, 0
      %p156 = por %p154, %p155
      %p157 = scmp.ne.s32.totalorder %s145, %s146
      %p158 = scmp.eq.s32.totalorder %s26, 1
      %p159 = por %p157, %p158
      %p161 = scmp.ne.s32.totalorder %s146, %s160
      %p162 = scmp.eq.s32.totalorder %s26, 0
      %p163 = por %p161, %p162
      %s164 = ssub.s32 %s20, %s27
      %p165 = scmp.eq.s32.totalorder %s164, 0
      %s167 = sadd.s32 %s166, 1
      %s168 = scalar_select %p165, %s166, %s167
      %p171 = pneg %p165
      %p172 = scmp.eq.s32.totalorder %s20, 1
      %p173 = por %p171, %p172
      %p174 = scmp.ne.s32.totalorder %s166, %s169
      %p175 = scmp.eq.s32.totalorder %s20, 0
      %p176 = por %p174, %p175
      %p177 = scmp.ne.s32.totalorder %s166, %s169
      %p178 = scmp.eq.s32.totalorder %s25, 1
      %p179 = por %p177, %p178
      %p180 = scmp.ne.s32.totalorder %s169, %s170
      %p181 = scmp.eq.s32.totalorder %s25, 0
      %p182 = por %p180, %p181
      %p183 = scmp.ne.s32.totalorder %s169, %s170
      %p184 = scmp.eq.s32.totalorder %s26, 1
      %p185 = por %p183, %p184
      %p187 = scmp.ne.s32.totalorder %s170, %s186
      %p188 = scmp.eq.s32.totalorder %s26, 0
      %p189 = por %p187, %p188
      %s190 = ssub.s32 %s20, %s27
      %p191 = scmp.eq.s32.totalorder %s190, 0
      %s193 = sadd.s32 %s192, 1
      %s194 = scalar_select %p191, %s192, %s193
      %p197 = pneg %p191
      %p198 = scmp.eq.s32.totalorder %s20, 1
      %p199 = por %p197, %p198
      %p200 = scmp.ne.s32.totalorder %s192, %s195
      %p201 = scmp.eq.s32.totalorder %s20, 0
      %p202 = por %p200, %p201
      %p203 = scmp.ne.s32.totalorder %s192, %s195
      %p204 = scmp.eq.s32.totalorder %s25, 1
      %p205 = por %p203, %p204
      %p206 = scmp.ne.s32.totalorder %s195, %s196
      %p207 = scmp.eq.s32.totalorder %s25, 0
      %p208 = por %p206, %p207
      %p209 = scmp.ne.s32.totalorder %s195, %s196
      %p210 = scmp.eq.s32.totalorder %s26, 1
      %p211 = por %p209, %p210
      %p213 = scmp.ne.s32.totalorder %s196, %s212
      %p214 = scmp.eq.s32.totalorder %s26, 0
      %p215 = por %p213, %p214
      %p216 = scmp.le.s32.totalorder 1, %s20
      %p217 = scmp.lt.s32.totalorder %s20, 3
      %p218 = pnand %p216, %p217
      %p219 = pneg %p218
      // Predicated region
      $region9: #{tpu_custom_call.1} parent=5 // pred_check
        _
      $region10: #{tpu_custom_call.1} parent=5 // pred_check_branch
        %221 = sbr.rel (%p218) target = $region12
      $region11: #{tpu_custom_call.1} parent=5 // pred_region
        %s222 = ssub.s32 %s20, 1
        // Predicated region
        $region13: #{tpu_custom_call.1} parent=11 // pred_check
          %p223 = pneg %p93
        $region14: #{tpu_custom_call.1} parent=11 // pred_check_branch
          %225 = sbr.rel (%p223) target = $region16
        $region15: #{tpu_custom_call.1} parent=11 // pred_region
          _
        $region16: #{tpu_custom_call.1} parent=11 // pred_fallthru
          _
        // Predicated region
        $region17: #{tpu_custom_call.1} parent=11 // pred_check
          %p226 = pneg %p114
        $region18: #{tpu_custom_call.1} parent=11 // pred_check_branch
          %228 = sbr.rel (%p226) target = $region20
        $region19: #{tpu_custom_call.1} parent=11 // pred_region
          _
        $region20: #{tpu_custom_call.1} parent=11 // pred_fallthru
          _
        // Predicated region
        $region21: #{tpu_custom_call.1} parent=11 // pred_check
          %p229 = pneg %p135
        $region22: #{tpu_custom_call.1} parent=11 // pred_check_branch
          %231 = sbr.rel (%p229) target = $region24
        $region23: #{tpu_custom_call.1} parent=11 // pred_region
          _
        $region24: #{tpu_custom_call.1} parent=11 // pred_fallthru
          _
        // Predicated region
        $region25: #{tpu_custom_call.1} parent=11 // pred_check
          %p232 = pneg %p156
        $region26: #{tpu_custom_call.1} parent=11 // pred_check_branch
          %234 = sbr.rel (%p232) target = $region28
        $region27: #{tpu_custom_call.1} parent=11 // pred_region
          _
        $region28: #{tpu_custom_call.1} parent=11 // pred_fallthru
          _
      $region12: #{tpu_custom_call.1} parent=5 // pred_fallthru
        _
      %p235 = scmp.lt.s32.totalorder %s20, 2
      // Predicated region
      $region29: #{tpu_custom_call.1} parent=5 // pred_check
        %p236 = pneg %p235
      $region30: #{tpu_custom_call.1} parent=5 // pred_check_branch
        %238 = sbr.rel (%p236) target = $region32
      $region31: #{tpu_custom_call.1} parent=5 // pred_region
        // Predicated region
        $region33: #{tpu_custom_call.1} parent=31 // pred_check
          %p239 = pneg %p40
        $region34: #{tpu_custom_call.1} parent=31 // pred_check_branch
          %241 = sbr.rel (%p239) target = $region36
        $region35: #{tpu_custom_call.1} parent=31 // pred_region
          %s242 = smul.u32 12, %s20
          %p243 = scmp.lt.s32.totalorder %s242, 23
          %s244 = scalar_select %p243, %s242, 23
          %s245 = smul.addr %s244, 4
          %s246 = scalar_lea.vmem %s0, %s245
          %s247 = smul.u32 12, %s20
        $region36: #{tpu_custom_call.1} parent=31 // pred_fallthru
          _
        // Predicated region
        $region37: #{tpu_custom_call.1} parent=31 // pred_check
          %p248 = pneg %p66
        $region38: #{tpu_custom_call.1} parent=31 // pred_check_branch
          %250 = sbr.rel (%p248) target = $region40
        $region39: #{tpu_custom_call.1} parent=31 // pred_region
          %s251 = smul.u32 12, %s20
          %p252 = scmp.lt.s32.totalorder %s251, 23
          %s253 = scalar_select %p252, %s251, 23
          %s254 = scalar_lea.vmem %s1, %s253
          %s255 = smul.u32 12, %s20
        $region40: #{tpu_custom_call.1} parent=31 // pred_fallthru
          _
      $region32: #{tpu_custom_call.1} parent=5 // pred_fallthru
        _
      %p256 = scmp.le.s32.totalorder 1, %s20
      %p257 = scmp.lt.s32.totalorder %s20, 3
      %p258 = pnand %p256, %p257
      %p259 = pneg %p258
      // Predicated region
      $region41: #{tpu_custom_call.1} parent=5 // pred_check
        _
      $region42: #{tpu_custom_call.1} parent=5 // pred_check_branch
        %261 = sbr.rel (%p258) target = $region44
      $region43: #{tpu_custom_call.1} parent=5 // pred_region
        %s262 = ssub.s32 %s20, 1
        %s263 = smul.u32 12, %s25
        %p264 = scmp.lt.s32.totalorder %s263, 23
        %s265 = scalar_select %p264, %s263, 23
        %s266 = smul.addr %s265, 4
        %s267 = scalar_lea.vmem %s0, %s266
        %p268 = pneg %p46
        %p269 = pneg %p43
        %s270 = smul.u32 12, %s25
        %p271 = scmp.lt.s32.totalorder %s270, 23
        %s272 = scalar_select %p271, %s270, 23
        %s273 = scalar_lea.vmem %s1, %s272
        %p274 = pneg %p72
        %p275 = pneg %p69
        %p276 = pneg %p93
        %p277 = pneg %p90
        %p278 = pneg %p114
        %p279 = pneg %p111
        %p280 = pneg %p135
        %p281 = pneg %p132
        %p282 = pneg %p156
        %p283 = pneg %p153
        %p284 = pneg %p182
        %p285 = pneg %p179
        %s286 = sand.u32 %s169, 1
        %s287 = scalar_lea.sflag [#allocation3], %s286
        %s288 = sand.u32 %s169, 1
        %s289 = scalar_lea.vmem [#allocation2], %s288
        %p290 = pneg %p208
        %p291 = pneg %p205
        %s292 = sand.u32 %s195, 1
        %s293 = scalar_lea.sflag [#allocation5], %s292
        %s294 = sand.u32 %s195, 1
        %s295 = smul.addr %s294, 96
        %s296 = scalar_lea.vmem [#allocation4], %s295
        %s297 = smul.u32 12, %s25
        %p298 = scmp.lt.s32.totalorder %s297, 23
        %s299 = scalar_select %p298, %s297, 23
        %s300 = smul.addr %s299, 4
        %s301 = scalar_lea.vmem %s0, %s300
        %s302 = smul.u32 12, %s25
        %s303 = smul.u32 12, %s25
        %p304 = scmp.lt.s32.totalorder %s303, 23
        %s305 = scalar_select %p304, %s303, 23
        %s306 = scalar_lea.vmem %s1, %s305
        %s307 = smul.u32 12, %s25
        %s308 = smul.u32 12, %s25
        %v310 = vld [vmem:[%s2] sm:$0xf]
        %v311 = vld [vmem:[%s2 + $0x4] sm:$0xf]
        %v312 = vld [vmem:[%s2 + $0x8] sm:$0xf]
        %v313 = vld [vmem:[%s2 + $0xc] sm:$0xf]
        %v314 = vld [vmem:[%s2 + $0x10] sm:$0xf]
        %v315 = vld [vmem:[%s2 + $0x14] sm:$0xf]
        %v316 = vld [vmem:[%s2 + $0x18] sm:$0xf]
        %v317 = vld [vmem:[%s2 + $0x1c] sm:$0xf]
        %v318 = vld [vmem:[%s301] sm:$0xff]
        %v319 = vld [vmem:[%s301 + $0x8] sm:$0xff]
        %v320 = vld [vmem:[%s301 + $0x10] sm:$0xff]
        %v321 = vld [vmem:[%s301 + $0x18] sm:$0xff]
        %v322 = vld [vmem:[%s301 + $0x20] sm:$0xff]
        %v323 = vld [vmem:[%s301 + $0x28] sm:$0xff]
        %v324 = vld [vmem:[%s3] sm:$0xff]
        %v325 = vld [vmem:[%s3 + $0x8] sm:$0xff]
        %v326 = vld [vmem:[%s3 + $0x10] sm:$0xff]
        %v327 = vld [vmem:[%s3 + $0x18] sm:$0xff]
        %v328 = vld [vmem:[%s3 + $0x20] sm:$0xff]
        %v329 = vld [vmem:[%s3 + $0x28] sm:$0xff]
        %v330 = vld [vmem:[%s3 + $0x30] sm:$0xff]
        %v331 = vld [vmem:[%s3 + $0x38] sm:$0xff]
        %333 = vset.pattern.permute.xlu0 0
        %334 = vperm.xlu0 %333, %v324
        %v335 = vpop.permute.xlu0 %334
        %338 = vset.pattern.permute.xlu0 0
        %339 = vperm.xlu0 %338, %v325
        %v340 = vpop.permute.xlu0 %339
        %343 = vset.pattern.permute.xlu0 0
        %344 = vperm.xlu0 %343, %v326
        %v345 = vpop.permute.xlu0 %344
        %348 = vset.pattern.permute.xlu0 0
        %349 = vperm.xlu0 %348, %v327
        %v350 = vpop.permute.xlu0 %349
        %353 = vset.pattern.permute.xlu0 0
        %354 = vperm.xlu0 %353, %v328
        %v355 = vpop.permute.xlu0 %354
        %358 = vset.pattern.permute.xlu0 0
        %359 = vperm.xlu0 %358, %v329
        %v360 = vpop.permute.xlu0 %359
        %363 = vset.pattern.permute.xlu0 0
        %364 = vperm.xlu0 %363, %v330
        %v365 = vpop.permute.xlu0 %364
        %368 = vset.pattern.permute.xlu0 0
        %369 = vperm.xlu0 %368, %v331
        %v370 = vpop.permute.xlu0 %369
        %v380 = vunpack.c.l.b16 %v310
        %v381 = vunpack.c.l.b16 %v311
        %v382 = vunpack.c.l.b16 %v312
        %v383 = vunpack.c.l.b16 %v313
        %v384 = vunpack.c.l.b16 %v314
        %v385 = vunpack.c.l.b16 %v315
        %v386 = vunpack.c.l.b16 %v316
        %v387 = vunpack.c.l.b16 %v317
        %v388 = vpack.c.b16 %v381, %v380
        %v389 = vpack.c.b16 %v383, %v382
        %v390 = vpack.c.b16 %v385, %v384
        %v391 = vpack.c.b16 %v387, %v386
        %v398 = vunpack.c.l.b16 %v318
        %v399 = vunpack.c.h.b16 %v318
        %v400 = vunpack.c.l.b16 %v319
        %v401 = vunpack.c.h.b16 %v319
        %v402 = vunpack.c.l.b16 %v320
        %v403 = vunpack.c.h.b16 %v320
        %v404 = vunpack.c.l.b16 %v321
        %v405 = vunpack.c.h.b16 %v321
        %v406 = vunpack.c.l.b16 %v322
        %v407 = vunpack.c.h.b16 %v322
        %v408 = vunpack.c.l.b16 %v323
        %v409 = vunpack.c.h.b16 %v323
        %v410 = vpack.c.b16 %v398, %v398
        %v411 = vpack.c.b16 %v399, %v399
        %v412 = vpack.c.b16 %v400, %v400
        %v413 = vpack.c.b16 %v401, %v401
        %v414 = vpack.c.b16 %v402, %v402
        %v415 = vpack.c.b16 %v403, %v403
        %v416 = vpack.c.b16 %v404, %v404
        %v417 = vpack.c.b16 %v405, %v405
        %v418 = vpack.c.b16 %v406, %v406
        %v419 = vpack.c.b16 %v407, %v407
        %v420 = vpack.c.b16 %v408, %v408
        %v421 = vpack.c.b16 %v409, %v409
        %vm422 = vcmask 64512
        %v424 = vsel %vm422, %v388, 0
        %v427 = vsel %vm422, %v389, 0
        %v430 = vsel %vm422, %v390, 0
        %v433 = vsel %vm422, %v391, 0
        %vm435 = vcmask 1043456
        %v437 = vsel %vm435, %v410, 0
        %v440 = vsel %vm435, %v411, 0
        %v443 = vsel %vm435, %v412, 0
        %v446 = vsel %vm435, %v413, 0
        %v449 = vsel %vm435, %v414, 0
        %v452 = vsel %vm435, %v415, 0
        %v455 = vsel %vm435, %v416, 0
        %v458 = vsel %vm435, %v417, 0
        %v461 = vsel %vm435, %v418, 0
        %v464 = vsel %vm435, %v419, 0
        %v467 = vsel %vm435, %v420, 0
        %v470 = vsel %vm435, %v421, 0
        %472 = vmatprep.subr.bf16.mxu0 %v440
        %473 = vmatpush1.bf16.msra.mxu0 %v437
        %474 = vmatprep.subr.bf16.mxu0 0
        %475 = vmatpush1.bf16.msra.mxu0 0
        %476 = vmatprep.subr.bf16.mxu0 0
        %477 = vmatpush1.bf16.msra.mxu0 0
        %478 = vmatprep.subr.bf16.mxu0 0
        %479 = vmatpush1.bf16.msra.mxu0 0
        %480 = vmatprep.subr.bf16.mxu0 0
        %481 = vmatpush1.bf16.msra.mxu0 0
        %482 = vmatprep.subr.bf16.mxu0 0
        %483 = vmatpush1.bf16.msra.mxu0 0
        %484 = vmatprep.subr.bf16.mxu0 0
        %485 = vmatpush1.bf16.msra.mxu0 0
        %486 = vmatprep.subr.bf16.mxu0 0
        %487 = vmatpush1.bf16.msra.mxu0 0
        %488 = vmatprep.subr.bf16.mxu0 0
        %489 = vmatpush1.bf16.msra.mxu0 0
        %490 = vmatprep.subr.bf16.mxu0 0
        %491 = vmatpush1.bf16.msra.mxu0 0
        %492 = vmatprep.subr.bf16.mxu0 0
        %493 = vmatpush1.bf16.msra.mxu0 0
        %494 = vmatprep.subr.bf16.mxu0 0
        %495 = vmatpush1.bf16.msra.mxu0 0
        %496 = vmatprep.subr.bf16.mxu0 0
        %497 = vmatpush1.bf16.msra.mxu0 0
        %498 = vmatprep.subr.bf16.mxu0 0
        %499 = vmatpush1.bf16.msra.mxu0 0
        %500 = vmatprep.subr.bf16.mxu0 0
        %501 = vmatpush1.bf16.msra.mxu0 0
        %502 = vmatprep.subr.bf16.mxu0 0
        %503 = vmatpush1.bf16.msra.mxu0 0
        %504 = vmatprep.mubr.bf16.mxu0 0
        %505 = vmatmul.mubr.bf16.gmra.mrb[0].mxu0 %v424
        %v506 = vpop.f32.mrb[0].mxu0
        %v507 = vadd.f32 %v335, %v506
        %v508 = vpop.f32.mrb[0].mxu0
        %v509 = vadd.f32 %v335, %v508
        %v510 = vpop.f32.mrb[0].mxu0
        %v511 = vadd.f32 %v340, %v510
        %v512 = vpop.f32.mrb[0].mxu0
        %v513 = vadd.f32 %v340, %v512
        %514 = vmatprep.mubr.bf16.mxu0 0
        %515 = vmatmul.mubr.bf16.gmra.mrb[0].mxu0 %v427
        %v516 = vpop.f32.mrb[0].mxu0
        %v517 = vadd.f32 %v345, %v516
        %v518 = vpop.f32.mrb[0].mxu0
        %v519 = vadd.f32 %v345, %v518
        %v520 = vpop.f32.mrb[0].mxu0
        %v521 = vadd.f32 %v350, %v520
        %v522 = vpop.f32.mrb[0].mxu0
        %v523 = vadd.f32 %v350, %v522
        %524 = vmatprep.mubr.bf16.mxu0 0
        %525 = vmatmul.mubr.bf16.gmra.mrb[0].mxu0 %v430
        %v526 = vpop.f32.mrb[0].mxu0
        %v527 = vadd.f32 %v355, %v526
        %v528 = vpop.f32.mrb[0].mxu0
        %v529 = vadd.f32 %v355, %v528
        %v530 = vpop.f32.mrb[0].mxu0
        %v531 = vadd.f32 %v360, %v530
        %v532 = vpop.f32.mrb[0].mxu0
        %v533 = vadd.f32 %v360, %v532
        %534 = vmatprep.mubr.bf16.mxu0 0
        %535 = vmatmul.mubr.bf16.gmra.mrb[0].mxu0 %v433
        %v536 = vpop.f32.mrb[0].mxu0
        %v537 = vadd.f32 %v365, %v536
        %v538 = vpop.f32.mrb[0].mxu0
        %v539 = vadd.f32 %v365, %v538
        %v540 = vpop.f32.mrb[0].mxu0
        %v541 = vadd.f32 %v370, %v540
        %v542 = vpop.f32.mrb[0].mxu0
        %v543 = vadd.f32 %v370, %v542
        %544 = vdwg.mxu0
        %545 = vmatprep.subr.bf16.mxu0 %v446
        %546 = vmatpush1.bf16.msra.mxu0 %v443
        %547 = vmatprep.subr.bf16.mxu0 0
        %548 = vmatpush1.bf16.msra.mxu0 0
        %549 = vmatprep.subr.bf16.mxu0 0
        %550 = vmatpush1.bf16.msra.mxu0 0
        %551 = vmatprep.subr.bf16.mxu0 0
        %552 = vmatpush1.bf16.msra.mxu0 0
        %553 = vmatprep.subr.bf16.mxu0 0
        %554 = vmatpush1.bf16.msra.mxu0 0
        %555 = vmatprep.subr.bf16.mxu0 0
        %556 = vmatpush1.bf16.msra.mxu0 0
        %557 = vmatprep.subr.bf16.mxu0 0
        %558 = vmatpush1.bf16.msra.mxu0 0
        %559 = vmatprep.subr.bf16.mxu0 0
        %560 = vmatpush1.bf16.msra.mxu0 0
        %561 = vmatprep.subr.bf16.mxu0 0
        %562 = vmatpush1.bf16.msra.mxu0 0
        %563 = vmatprep.subr.bf16.mxu0 0
        %564 = vmatpush1.bf16.msra.mxu0 0
        %565 = vmatprep.subr.bf16.mxu0 0
        %566 = vmatpush1.bf16.msra.mxu0 0
        %567 = vmatprep.subr.bf16.mxu0 0
        %568 = vmatpush1.bf16.msra.mxu0 0
        %569 = vmatprep.subr.bf16.mxu0 0
        %570 = vmatpush1.bf16.msra.mxu0 0
        %571 = vmatprep.subr.bf16.mxu0 0
        %572 = vmatpush1.bf16.msra.mxu0 0
        %573 = vmatprep.subr.bf16.mxu0 0
        %574 = vmatpush1.bf16.msra.mxu0 0
        %575 = vmatprep.subr.bf16.mxu0 0
        %576 = vmatpush1.bf16.msra.mxu0 0
        %577 = vmatprep.mubr.bf16.mxu0 0
        %578 = vmatmul.mubr.bf16.gmra.mrb[0].mxu0 %v424
        %v579 = vpop.f32.mrb[0].mxu0
        %v580 = vadd.f32 %v335, %v579
        %v581 = vpop.f32.mrb[0].mxu0
        %v582 = vadd.f32 %v335, %v581
        %v583 = vpop.f32.mrb[0].mxu0
        %v584 = vadd.f32 %v340, %v583
        %v585 = vpop.f32.mrb[0].mxu0
        %v586 = vadd.f32 %v340, %v585
        %587 = vmatprep.mubr.bf16.mxu0 0
        %588 = vmatmul.mubr.bf16.gmra.mrb[0].mxu0 %v427
        %v589 = vpop.f32.mrb[0].mxu0
        %v590 = vadd.f32 %v345, %v589
        %v591 = vpop.f32.mrb[0].mxu0
        %v592 = vadd.f32 %v345, %v591
        %v593 = vpop.f32.mrb[0].mxu0
        %v594 = vadd.f32 %v350, %v593
        %v595 = vpop.f32.mrb[0].mxu0
        %v596 = vadd.f32 %v350, %v595
        %597 = vmatprep.mubr.bf16.mxu0 0
        %598 = vmatmul.mubr.bf16.gmra.mrb[0].mxu0 %v430
        %v599 = vpop.f32.mrb[0].mxu0
        %v600 = vadd.f32 %v355, %v599
        %v601 = vpop.f32.mrb[0].mxu0
        %v602 = vadd.f32 %v355, %v601
        %v603 = vpop.f32.mrb[0].mxu0
        %v604 = vadd.f32 %v360, %v603
        %v605 = vpop.f32.mrb[0].mxu0
        %v606 = vadd.f32 %v360, %v605
        %607 = vmatprep.mubr.bf16.mxu0 0
        %608 = vmatmul.mubr.bf16.gmra.mrb[0].mxu0 %v433
        %v609 = vpop.f32.mrb[0].mxu0
        %v610 = vadd.f32 %v365, %v609
        %v611 = vpop.f32.mrb[0].mxu0
        %v612 = vadd.f32 %v365, %v611
        %v613 = vpop.f32.mrb[0].mxu0
        %v614 = vadd.f32 %v370, %v613
        %v615 = vpop.f32.mrb[0].mxu0
        %v616 = vadd.f32 %v370, %v615
        %617 = vdwg.mxu0
        %618 = vmatprep.subr.bf16.mxu0 %v452
        %619 = vmatpush1.bf16.msra.mxu0 %v449
        %620 = vmatprep.subr.bf16.mxu0 0
        %621 = vmatpush1.bf16.msra.mxu0 0
        %622 = vmatprep.subr.bf16.mxu0 0
        %623 = vmatpush1.bf16.msra.mxu0 0
        %624 = vmatprep.subr.bf16.mxu0 0
        %625 = vmatpush1.bf16.msra.mxu0 0
        %626 = vmatprep.subr.bf16.mxu0 0
        %627 = vmatpush1.bf16.msra.mxu0 0
        %628 = vmatprep.subr.bf16.mxu0 0
        %629 = vmatpush1.bf16.msra.mxu0 0
        %630 = vmatprep.subr.bf16.mxu0 0
        %631 = vmatpush1.bf16.msra.mxu0 0
        %632 = vmatprep.subr.bf16.mxu0 0
        %633 = vmatpush1.bf16.msra.mxu0 0
        %634 = vmatprep.subr.bf16.mxu0 0
        %635 = vmatpush1.bf16.msra.mxu0 0
        %636 = vmatprep.subr.bf16.mxu0 0
        %637 = vmatpush1.bf16.msra.mxu0 0
        %638 = vmatprep.subr.bf16.mxu0 0
        %639 = vmatpush1.bf16.msra.mxu0 0
        %640 = vmatprep.subr.bf16.mxu0 0
        %641 = vmatpush1.bf16.msra.mxu0 0
        %642 = vmatprep.subr.bf16.mxu0 0
        %643 = vmatpush1.bf16.msra.mxu0 0
        %644 = vmatprep.subr.bf16.mxu0 0
        %645 = vmatpush1.bf16.msra.mxu0 0
        %646 = vmatprep.subr.bf16.mxu0 0
        %647 = vmatpush1.bf16.msra.mxu0 0
        %648 = vmatprep.subr.bf16.mxu0 0
        %649 = vmatpush1.bf16.msra.mxu0 0
        %650 = vmatprep.mubr.bf16.mxu0 0
        %651 = vmatmul.mubr.bf16.gmra.mrb[0].mxu0 %v424
        %v652 = vpop.f32.mrb[0].mxu0
        %v653 = vadd.f32 %v335, %v652
        %v654 = vpop.f32.mrb[0].mxu0
        %v655 = vadd.f32 %v335, %v654
        %v656 = vpop.f32.mrb[0].mxu0
        %v657 = vadd.f32 %v340, %v656
        %v658 = vpop.f32.mrb[0].mxu0
        %v659 = vadd.f32 %v340, %v658
        %660 = vmatprep.mubr.bf16.mxu0 0
        %661 = vmatmul.mubr.bf16.gmra.mrb[0].mxu0 %v427
        %v662 = vpop.f32.mrb[0].mxu0
        %v663 = vadd.f32 %v345, %v662
        %v664 = vpop.f32.mrb[0].mxu0
        %v665 = vadd.f32 %v345, %v664
        %v666 = vpop.f32.mrb[0].mxu0
        %v667 = vadd.f32 %v350, %v666
        %v668 = vpop.f32.mrb[0].mxu0
        %v669 = vadd.f32 %v350, %v668
        %670 = vmatprep.mubr.bf16.mxu0 0
        %671 = vmatmul.mubr.bf16.gmra.mrb[0].mxu0 %v430
        %v672 = vpop.f32.mrb[0].mxu0
        %v673 = vadd.f32 %v355, %v672
        %v674 = vpop.f32.mrb[0].mxu0
        %v675 = vadd.f32 %v355, %v674
        %v676 = vpop.f32.mrb[0].mxu0
        %v677 = vadd.f32 %v360, %v676
        %v678 = vpop.f32.mrb[0].mxu0
        %v679 = vadd.f32 %v360, %v678
        %680 = vmatprep.mubr.bf16.mxu0 0
        %681 = vmatmul.mubr.bf16.gmra.mrb[0].mxu0 %v433
        %v682 = vpop.f32.mrb[0].mxu0
        %v683 = vadd.f32 %v365, %v682
        %v684 = vpop.f32.mrb[0].mxu0
        %v685 = vadd.f32 %v365, %v684
        %v686 = vpop.f32.mrb[0].mxu0
        %v687 = vadd.f32 %v370, %v686
        %v688 = vpop.f32.mrb[0].mxu0
        %v689 = vadd.f32 %v370, %v688
        %690 = vdwg.mxu0
        %691 = vmatprep.subr.bf16.mxu0 %v458
        %692 = vmatpush1.bf16.msra.mxu0 %v455
        %693 = vmatprep.subr.bf16.mxu0 0
        %694 = vmatpush1.bf16.msra.mxu0 0
        %695 = vmatprep.subr.bf16.mxu0 0
        %696 = vmatpush1.bf16.msra.mxu0 0
        %697 = vmatprep.subr.bf16.mxu0 0
        %698 = vmatpush1.bf16.msra.mxu0 0
        %699 = vmatprep.subr.bf16.mxu0 0
        %700 = vmatpush1.bf16.msra.mxu0 0
        %701 = vmatprep.subr.bf16.mxu0 0
        %702 = vmatpush1.bf16.msra.mxu0 0
        %703 = vmatprep.subr.bf16.mxu0 0
        %704 = vmatpush1.bf16.msra.mxu0 0
        %705 = vmatprep.subr.bf16.mxu0 0
        %706 = vmatpush1.bf16.msra.mxu0 0
        %707 = vmatprep.subr.bf16.mxu0 0
        %708 = vmatpush1.bf16.msra.mxu0 0
        %709 = vmatprep.subr.bf16.mxu0 0
        %710 = vmatpush1.bf16.msra.mxu0 0
        %711 = vmatprep.subr.bf16.mxu0 0
        %712 = vmatpush1.bf16.msra.mxu0 0
        %713 = vmatprep.subr.bf16.mxu0 0
        %714 = vmatpush1.bf16.msra.mxu0 0
        %715 = vmatprep.subr.bf16.mxu0 0
        %716 = vmatpush1.bf16.msra.mxu0 0
        %717 = vmatprep.subr.bf16.mxu0 0
        %718 = vmatpush1.bf16.msra.mxu0 0
        %719 = vmatprep.subr.bf16.mxu0 0
        %720 = vmatpush1.bf16.msra.mxu0 0
        %721 = vmatprep.subr.bf16.mxu0 0
        %722 = vmatpush1.bf16.msra.mxu0 0
        %723 = vmatprep.mubr.bf16.mxu0 0
        %724 = vmatmul.mubr.bf16.gmra.mrb[0].mxu0 %v424
        %v725 = vpop.f32.mrb[0].mxu0
        %v726 = vadd.f32 %v335, %v725
        %v727 = vpop.f32.mrb[0].mxu0
        %v728 = vadd.f32 %v335, %v727
        %v729 = vpop.f32.mrb[0].mxu0
        %v730 = vadd.f32 %v340, %v729
        %v731 = vpop.f32.mrb[0].mxu0
        %v732 = vadd.f32 %v340, %v731
        %733 = vmatprep.mubr.bf16.mxu0 0
        %734 = vmatmul.mubr.bf16.gmra.mrb[0].mxu0 %v427
        %v735 = vpop.f32.mrb[0].mxu0
        %v736 = vadd.f32 %v345, %v735
        %v737 = vpop.f32.mrb[0].mxu0
        %v738 = vadd.f32 %v345, %v737
        %v739 = vpop.f32.mrb[0].mxu0
        %v740 = vadd.f32 %v350, %v739
        %v741 = vpop.f32.mrb[0].mxu0
        %v742 = vadd.f32 %v350, %v741
        %743 = vmatprep.mubr.bf16.mxu0 0
        %744 = vmatmul.mubr.bf16.gmra.mrb[0].mxu0 %v430
        %v745 = vpop.f32.mrb[0].mxu0
        %v746 = vadd.f32 %v355, %v745
        %v747 = vpop.f32.mrb[0].mxu0
        %v748 = vadd.f32 %v355, %v747
        %v749 = vpop.f32.mrb[0].mxu0
        %v750 = vadd.f32 %v360, %v749
        %v751 = vpop.f32.mrb[0].mxu0
        %v752 = vadd.f32 %v360, %v751
        %753 = vmatprep.mubr.bf16.mxu0 0
        %754 = vmatmul.mubr.bf16.gmra.mrb[0].mxu0 %v433
        %v755 = vpop.f32.mrb[0].mxu0
        %v756 = vadd.f32 %v365, %v755
        %v757 = vpop.f32.mrb[0].mxu0
        %v758 = vadd.f32 %v365, %v757
        %v759 = vpop.f32.mrb[0].mxu0
        %v760 = vadd.f32 %v370, %v759
        %v761 = vpop.f32.mrb[0].mxu0
        %v762 = vadd.f32 %v370, %v761
        %763 = vdwg.mxu0
        %764 = vmatprep.subr.bf16.mxu0 %v464
        %765 = vmatpush1.bf16.msra.mxu0 %v461
        %766 = vmatprep.subr.bf16.mxu0 0
        %767 = vmatpush1.bf16.msra.mxu0 0
        %768 = vmatprep.subr.bf16.mxu0 0
        %769 = vmatpush1.bf16.msra.mxu0 0
        %770 = vmatprep.subr.bf16.mxu0 0
        %771 = vmatpush1.bf16.msra.mxu0 0
        %772 = vmatprep.subr.bf16.mxu0 0
        %773 = vmatpush1.bf16.msra.mxu0 0
        %774 = vmatprep.subr.bf16.mxu0 0
        %775 = vmatpush1.bf16.msra.mxu0 0
        %776 = vmatprep.subr.bf16.mxu0 0
        %777 = vmatpush1.bf16.msra.mxu0 0
        %778 = vmatprep.subr.bf16.mxu0 0
        %779 = vmatpush1.bf16.msra.mxu0 0
        %780 = vmatprep.subr.bf16.mxu0 0
        %781 = vmatpush1.bf16.msra.mxu0 0
        %782 = vmatprep.subr.bf16.mxu0 0
        %783 = vmatpush1.bf16.msra.mxu0 0
        %784 = vmatprep.subr.bf16.mxu0 0
        %785 = vmatpush1.bf16.msra.mxu0 0
        %786 = vmatprep.subr.bf16.mxu0 0
        %787 = vmatpush1.bf16.msra.mxu0 0
        %788 = vmatprep.subr.bf16.mxu0 0
        %789 = vmatpush1.bf16.msra.mxu0 0
        %790 = vmatprep.subr.bf16.mxu0 0
        %791 = vmatpush1.bf16.msra.mxu0 0
        %792 = vmatprep.subr.bf16.mxu0 0
        %793 = vmatpush1.bf16.msra.mxu0 0
        %794 = vmatprep.subr.bf16.mxu0 0
        %795 = vmatpush1.bf16.msra.mxu0 0
        %796 = vmatprep.mubr.bf16.mxu0 0
        %797 = vmatmul.mubr.bf16.gmra.mrb[0].mxu0 %v424
        %v798 = vpop.f32.mrb[0].mxu0
        %v799 = vadd.f32 %v335, %v798
        %v800 = vpop.f32.mrb[0].mxu0
        %v801 = vadd.f32 %v335, %v800
        %v802 = vpop.f32.mrb[0].mxu0
        %v803 = vadd.f32 %v340, %v802
        %v804 = vpop.f32.mrb[0].mxu0
        %v805 = vadd.f32 %v340, %v804
        %806 = vmatprep.mubr.bf16.mxu0 0
        %807 = vmatmul.mubr.bf16.gmra.mrb[0].mxu0 %v427
        %v808 = vpop.f32.mrb[0].mxu0
        %v809 = vadd.f32 %v345, %v808
        %v810 = vpop.f32.mrb[0].mxu0
        %v811 = vadd.f32 %v345, %v810
        %v812 = vpop.f32.mrb[0].mxu0
        %v813 = vadd.f32 %v350, %v812
        %v814 = vpop.f32.mrb[0].mxu0
        %v815 = vadd.f32 %v350, %v814
        %816 = vmatprep.mubr.bf16.mxu0 0
        %817 = vmatmul.mubr.bf16.gmra.mrb[0].mxu0 %v430
        %v818 = vpop.f32.mrb[0].mxu0
        %v819 = vadd.f32 %v355, %v818
        %v820 = vpop.f32.mrb[0].mxu0
        %v821 = vadd.f32 %v355, %v820
        %v822 = vpop.f32.mrb[0].mxu0
        %v823 = vadd.f32 %v360, %v822
        %v824 = vpop.f32.mrb[0].mxu0
        %v825 = vadd.f32 %v360, %v824
        %826 = vmatprep.mubr.bf16.mxu0 0
        %827 = vmatmul.mubr.bf16.gmra.mrb[0].mxu0 %v433
        %v828 = vpop.f32.mrb[0].mxu0
        %v829 = vadd.f32 %v365, %v828
        %v830 = vpop.f32.mrb[0].mxu0
        %v831 = vadd.f32 %v365, %v830
        %v832 = vpop.f32.mrb[0].mxu0
        %v833 = vadd.f32 %v370, %v832
        %v834 = vpop.f32.mrb[0].mxu0
        %v835 = vadd.f32 %v370, %v834
        %836 = vdwg.mxu0
        %837 = vmatprep.subr.bf16.mxu0 %v470
        %838 = vmatpush1.bf16.msra.mxu0 %v467
        %839 = vmatprep.subr.bf16.mxu0 0
        %840 = vmatpush1.bf16.msra.mxu0 0
        %841 = vmatprep.subr.bf16.mxu0 0
        %842 = vmatpush1.bf16.msra.mxu0 0
        %843 = vmatprep.subr.bf16.mxu0 0
        %844 = vmatpush1.bf16.msra.mxu0 0
        %845 = vmatprep.subr.bf16.mxu0 0
        %846 = vmatpush1.bf16.msra.mxu0 0
        %847 = vmatprep.subr.bf16.mxu0 0
        %848 = vmatpush1.bf16.msra.mxu0 0
        %849 = vmatprep.subr.bf16.mxu0 0
        %850 = vmatpush1.bf16.msra.mxu0 0
        %851 = vmatprep.subr.bf16.mxu0 0
        %852 = vmatpush1.bf16.msra.mxu0 0
        %853 = vmatprep.subr.bf16.mxu0 0
        %854 = vmatpush1.bf16.msra.mxu0 0
        %855 = vmatprep.subr.bf16.mxu0 0
        %856 = vmatpush1.bf16.msra.mxu0 0
        %857 = vmatprep.subr.bf16.mxu0 0
        %858 = vmatpush1.bf16.msra.mxu0 0
        %859 = vmatprep.subr.bf16.mxu0 0
        %860 = vmatpush1.bf16.msra.mxu0 0
        %861 = vmatprep.subr.bf16.mxu0 0
        %862 = vmatpush1.bf16.msra.mxu0 0
        %863 = vmatprep.subr.bf16.mxu0 0
        %864 = vmatpush1.bf16.msra.mxu0 0
        %865 = vmatprep.subr.bf16.mxu0 0
        %866 = vmatpush1.bf16.msra.mxu0 0
        %867 = vmatprep.subr.bf16.mxu0 0
        %868 = vmatpush1.bf16.msra.mxu0 0
        %869 = vmatprep.mubr.bf16.mxu0 0
        %870 = vmatmul.mubr.bf16.gmra.mrb[0].mxu0 %v424
        %v871 = vpop.f32.mrb[0].mxu0
        %v872 = vadd.f32 %v335, %v871
        %v873 = vpop.f32.mrb[0].mxu0
        %v874 = vadd.f32 %v335, %v873
        %v875 = vpop.f32.mrb[0].mxu0
        %v876 = vadd.f32 %v340, %v875
        %v877 = vpop.f32.mrb[0].mxu0
        %v878 = vadd.f32 %v340, %v877
        %879 = vmatprep.mubr.bf16.mxu0 0
        %880 = vmatmul.mubr.bf16.gmra.mrb[0].mxu0 %v427
        %v881 = vpop.f32.mrb[0].mxu0
        %v882 = vadd.f32 %v345, %v881
        %v883 = vpop.f32.mrb[0].mxu0
        %v884 = vadd.f32 %v345, %v883
        %v885 = vpop.f32.mrb[0].mxu0
        %v886 = vadd.f32 %v350, %v885
        %v887 = vpop.f32.mrb[0].mxu0
        %v888 = vadd.f32 %v350, %v887
        %889 = vmatprep.mubr.bf16.mxu0 0
        %890 = vmatmul.mubr.bf16.gmra.mrb[0].mxu0 %v430
        %v891 = vpop.f32.mrb[0].mxu0
        %v892 = vadd.f32 %v355, %v891
        %v893 = vpop.f32.mrb[0].mxu0
        %v894 = vadd.f32 %v355, %v893
        %v895 = vpop.f32.mrb[0].mxu0
        %v896 = vadd.f32 %v360, %v895
        %v897 = vpop.f32.mrb[0].mxu0
        %v898 = vadd.f32 %v360, %v897
        %899 = vmatprep.mubr.bf16.mxu0 0
        %900 = vmatmul.mubr.bf16.gmra.mrb[0].mxu0 %v433
        %v901 = vpop.f32.mrb[0].mxu0
        %v902 = vadd.f32 %v365, %v901
        %v903 = vpop.f32.mrb[0].mxu0
        %v904 = vadd.f32 %v365, %v903
        %v905 = vpop.f32.mrb[0].mxu0
        %v906 = vadd.f32 %v370, %v905
        %v907 = vpop.f32.mrb[0].mxu0
        %v908 = vadd.f32 %v370, %v907
        %909 = vdwg.mxu0
        %v910 = vmax.f32 %v507, 0.0
        %v911 = vmax.f32 %v509, 0.0
        %v912 = vmax.f32 %v580, 0.0
        %v913 = vmax.f32 %v582, 0.0
        %v914 = vmax.f32 %v653, 0.0
        %v915 = vmax.f32 %v655, 0.0
        %v916 = vmax.f32 %v726, 0.0
        %v917 = vmax.f32 %v728, 0.0
        %v918 = vmax.f32 %v799, 0.0
        %v919 = vmax.f32 %v801, 0.0
        %v920 = vmax.f32 %v872, 0.0
        %v921 = vmax.f32 %v874, 0.0
        %v922 = vmax.f32 %v511, 0.0
        %v923 = vmax.f32 %v513, 0.0
        %v924 = vmax.f32 %v584, 0.0
        %v925 = vmax.f32 %v586, 0.0
        %v926 = vmax.f32 %v657, 0.0
        %v927 = vmax.f32 %v659, 0.0
        %v928 = vmax.f32 %v730, 0.0
        %v929 = vmax.f32 %v732, 0.0
        %v930 = vmax.f32 %v803, 0.0
        %v931 = vmax.f32 %v805, 0.0
        %v932 = vmax.f32 %v876, 0.0
        %v933 = vmax.f32 %v878, 0.0
        %v934 = vmax.f32 %v517, 0.0
        %v935 = vmax.f32 %v519, 0.0
        %v936 = vmax.f32 %v590, 0.0
        %v937 = vmax.f32 %v592, 0.0
        %v938 = vmax.f32 %v663, 0.0
        %v939 = vmax.f32 %v665, 0.0
        %v940 = vmax.f32 %v736, 0.0
        %v941 = vmax.f32 %v738, 0.0
        %v942 = vmax.f32 %v809, 0.0
        %v943 = vmax.f32 %v811, 0.0
        %v944 = vmax.f32 %v882, 0.0
        %v945 = vmax.f32 %v884, 0.0
        %v946 = vmax.f32 %v521, 0.0
        %v947 = vmax.f32 %v523, 0.0
        %v948 = vmax.f32 %v594, 0.0
        %v949 = vmax.f32 %v596, 0.0
        %v950 = vmax.f32 %v667, 0.0
        %v951 = vmax.f32 %v669, 0.0
        %v952 = vmax.f32 %v740, 0.0
        %v953 = vmax.f32 %v742, 0.0
        %v954 = vmax.f32 %v813, 0.0
        %v955 = vmax.f32 %v815, 0.0
        %v956 = vmax.f32 %v886, 0.0
        %v957 = vmax.f32 %v888, 0.0
        %v958 = vmax.f32 %v527, 0.0
        %v959 = vmax.f32 %v529, 0.0
        %v960 = vmax.f32 %v600, 0.0
        %v961 = vmax.f32 %v602, 0.0
        %v962 = vmax.f32 %v673, 0.0
        %v963 = vmax.f32 %v675, 0.0
        %v964 = vmax.f32 %v746, 0.0
        %v965 = vmax.f32 %v748, 0.0
        %v966 = vmax.f32 %v819, 0.0
        %v967 = vmax.f32 %v821, 0.0
        %v968 = vmax.f32 %v892, 0.0
        %v969 = vmax.f32 %v894, 0.0
        %v970 = vmax.f32 %v531, 0.0
        %v971 = vmax.f32 %v533, 0.0
        %v972 = vmax.f32 %v604, 0.0
        %v973 = vmax.f32 %v606, 0.0
        %v974 = vmax.f32 %v677, 0.0
        %v975 = vmax.f32 %v679, 0.0
        %v976 = vmax.f32 %v750, 0.0
        %v977 = vmax.f32 %v752, 0.0
        %v978 = vmax.f32 %v823, 0.0
        %v979 = vmax.f32 %v825, 0.0
        %v980 = vmax.f32 %v896, 0.0
        %v981 = vmax.f32 %v898, 0.0
        %v982 = vmax.f32 %v537, 0.0
        %v983 = vmax.f32 %v539, 0.0
        %v984 = vmax.f32 %v610, 0.0
        %v985 = vmax.f32 %v612, 0.0
        %v986 = vmax.f32 %v683, 0.0
        %v987 = vmax.f32 %v685, 0.0
        %v988 = vmax.f32 %v756, 0.0
        %v989 = vmax.f32 %v758, 0.0
        %v990 = vmax.f32 %v829, 0.0
        %v991 = vmax.f32 %v831, 0.0
        %v992 = vmax.f32 %v902, 0.0
        %v993 = vmax.f32 %v904, 0.0
        %v994 = vmax.f32 %v541, 0.0
        %v995 = vmax.f32 %v543, 0.0
        %v996 = vmax.f32 %v614, 0.0
        %v997 = vmax.f32 %v616, 0.0
        %v998 = vmax.f32 %v687, 0.0
        %v999 = vmax.f32 %v689, 0.0
        %v1000 = vmax.f32 %v760, 0.0
        %v1001 = vmax.f32 %v762, 0.0
        %v1002 = vmax.f32 %v833, 0.0
        %v1003 = vmax.f32 %v835, 0.0
        %v1004 = vmax.f32 %v906, 0.0
        %v1005 = vmax.f32 %v908, 0.0
        %v1006 = vld [vmem:[%s4] sm:$0xf]
        %v1007 = vld [vmem:[%s4 + $0x4] sm:$0xf]
        %v1008 = vpack.c.bf16 %v922, %v910
        %v1009 = vpack.c.bf16 %v923, %v911
        %v1010 = vpack.c.bf16 %v924, %v912
        %v1011 = vpack.c.bf16 %v925, %v913
        %v1012 = vpack.c.bf16 %v926, %v914
        %v1013 = vpack.c.bf16 %v927, %v915
        %v1014 = vpack.c.bf16 %v928, %v916
        %v1015 = vpack.c.bf16 %v929, %v917
        %v1016 = vpack.c.bf16 %v930, %v918
        %v1017 = vpack.c.bf16 %v931, %v919
        %v1018 = vpack.c.bf16 %v932, %v920
        %v1019 = vpack.c.bf16 %v933, %v921
        %v1020 = vpack.c.bf16 %v946, %v934
        %v1021 = vpack.c.bf16 %v947, %v935
        %v1022 = vpack.c.bf16 %v948, %v936
        %v1023 = vpack.c.bf16 %v949, %v937
        %v1024 = vpack.c.bf16 %v950, %v938
        %v1025 = vpack.c.bf16 %v951, %v939
        %v1026 = vpack.c.bf16 %v952, %v940
        %v1027 = vpack.c.bf16 %v953, %v941
        %v1028 = vpack.c.bf16 %v954, %v942
        %v1029 = vpack.c.bf16 %v955, %v943
        %v1030 = vpack.c.bf16 %v956, %v944
        %v1031 = vpack.c.bf16 %v957, %v945
        %v1032 = vpack.c.bf16 %v970, %v958
        %v1033 = vpack.c.bf16 %v971, %v959
        %v1034 = vpack.c.bf16 %v972, %v960
        %v1035 = vpack.c.bf16 %v973, %v961
        %v1036 = vpack.c.bf16 %v974, %v962
        %v1037 = vpack.c.bf16 %v975, %v963
        %v1038 = vpack.c.bf16 %v976, %v964
        %v1039 = vpack.c.bf16 %v977, %v965
        %v1040 = vpack.c.bf16 %v978, %v966
        %v1041 = vpack.c.bf16 %v979, %v967
        %v1042 = vpack.c.bf16 %v980, %v968
        %v1043 = vpack.c.bf16 %v981, %v969
        %v1044 = vpack.c.bf16 %v994, %v982
        %v1045 = vpack.c.bf16 %v995, %v983
        %v1046 = vpack.c.bf16 %v996, %v984
        %v1047 = vpack.c.bf16 %v997, %v985
        %v1048 = vpack.c.bf16 %v998, %v986
        %v1049 = vpack.c.bf16 %v999, %v987
        %v1050 = vpack.c.bf16 %v1000, %v988
        %v1051 = vpack.c.bf16 %v1001, %v989
        %v1052 = vpack.c.bf16 %v1002, %v990
        %v1053 = vpack.c.bf16 %v1003, %v991
        %v1054 = vpack.c.bf16 %v1004, %v992
        %v1055 = vpack.c.bf16 %v1005, %v993
        %v1056 = vld [vmem:[%s5] sm:$0xff]
        %v1057 = vld [vmem:[%s5 + $0x8] sm:$0xff]
        %1059 = vset.pattern.permute.xlu0 0
        %1060 = vperm.xlu0 %1059, %v1056
        %v1061 = vpop.permute.xlu0 %1060
        %1064 = vset.pattern.permute.xlu0 0
        %1065 = vperm.xlu0 %1064, %v1057
        %v1066 = vpop.permute.xlu0 %1065
        %v1070 = vunpack.c.l.b16 %v1006
        %v1071 = vunpack.c.l.b16 %v1007
        %v1072 = vpack.c.b16 %v1071, %v1070
        %vm1073 = vcmask 523264
        %v1075 = vsel %vm1073, %v1072, 0
        %1077 = vmatprep.subr.bf16.mxu0 %v1009
        %1078 = vmatpush1.bf16.msra.mxu0 %v1008
        %1079 = vmatprep.subr.bf16.mxu0 %v1021
        %1080 = vmatpush1.bf16.msra.mxu0 %v1020
        %1081 = vmatprep.subr.bf16.mxu0 %v1033
        %1082 = vmatpush1.bf16.msra.mxu0 %v1032
        %1083 = vmatprep.subr.bf16.mxu0 %v1045
        %1084 = vmatpush1.bf16.msra.mxu0 %v1044
        %1085 = vmatprep.subr.bf16.mxu0 0
        %1086 = vmatpush1.bf16.msra.mxu0 0
        %1087 = vmatprep.subr.bf16.mxu0 0
        %1088 = vmatpush1.bf16.msra.mxu0 0
        %1089 = vmatprep.subr.bf16.mxu0 0
        %1090 = vmatpush1.bf16.msra.mxu0 0
        %1091 = vmatprep.subr.bf16.mxu0 0
        %1092 = vmatpush1.bf16.msra.mxu0 0
        %1093 = vmatprep.subr.bf16.mxu0 0
        %1094 = vmatpush1.bf16.msra.mxu0 0
        %1095 = vmatprep.subr.bf16.mxu0 0
        %1096 = vmatpush1.bf16.msra.mxu0 0
        %1097 = vmatprep.subr.bf16.mxu0 0
        %1098 = vmatpush1.bf16.msra.mxu0 0
        %1099 = vmatprep.subr.bf16.mxu0 0
        %1100 = vmatpush1.bf16.msra.mxu0 0
        %1101 = vmatprep.subr.bf16.mxu0 0
        %1102 = vmatpush1.bf16.msra.mxu0 0
        %1103 = vmatprep.subr.bf16.mxu0 0
        %1104 = vmatpush1.bf16.msra.mxu0 0
        %1105 = vmatprep.subr.bf16.mxu0 0
        %1106 = vmatpush1.bf16.msra.mxu0 0
        %1107 = vmatprep.subr.bf16.mxu0 0
        %1108 = vmatpush1.bf16.msra.mxu0 0
        %1109 = vmatprep.mubr.bf16.mxu0 0
        %1110 = vmatmul.mubr.bf16.gmra.mrb[0].mxu0 %v1075
        %v1111 = vpop.f32.mrb[0].mxu0
        %v1112 = vadd.f32 %v1061, %v1111
        %v1113 = vpop.f32.mrb[0].mxu0
        %v1114 = vadd.f32 %v1061, %v1113
        %v1115 = vpop.f32.mrb[0].mxu0
        %v1116 = vadd.f32 %v1066, %v1115
        %v1117 = vpop.f32.mrb[0].mxu0
        %v1118 = vadd.f32 %v1066, %v1117
        %1119 = vdwg.mxu0
        %1120 = vmatprep.subr.bf16.mxu0 %v1011
        %1121 = vmatpush1.bf16.msra.mxu0 %v1010
        %1122 = vmatprep.subr.bf16.mxu0 %v1023
        %1123 = vmatpush1.bf16.msra.mxu0 %v1022
        %1124 = vmatprep.subr.bf16.mxu0 %v1035
        %1125 = vmatpush1.bf16.msra.mxu0 %v1034
        %1126 = vmatprep.subr.bf16.mxu0 %v1047
        %1127 = vmatpush1.bf16.msra.mxu0 %v1046
        %1128 = vmatprep.subr.bf16.mxu0 0
        %1129 = vmatpush1.bf16.msra.mxu0 0
        %1130 = vmatprep.subr.bf16.mxu0 0
        %1131 = vmatpush1.bf16.msra.mxu0 0
        %1132 = vmatprep.subr.bf16.mxu0 0
        %1133 = vmatpush1.bf16.msra.mxu0 0
        %1134 = vmatprep.subr.bf16.mxu0 0
        %1135 = vmatpush1.bf16.msra.mxu0 0
        %1136 = vmatprep.subr.bf16.mxu0 0
        %1137 = vmatpush1.bf16.msra.mxu0 0
        %1138 = vmatprep.subr.bf16.mxu0 0
        %1139 = vmatpush1.bf16.msra.mxu0 0
        %1140 = vmatprep.subr.bf16.mxu0 0
        %1141 = vmatpush1.bf16.msra.mxu0 0
        %1142 = vmatprep.subr.bf16.mxu0 0
        %1143 = vmatpush1.bf16.msra.mxu0 0
        %1144 = vmatprep.subr.bf16.mxu0 0
        %1145 = vmatpush1.bf16.msra.mxu0 0
        %1146 = vmatprep.subr.bf16.mxu0 0
        %1147 = vmatpush1.bf16.msra.mxu0 0
        %1148 = vmatprep.subr.bf16.mxu0 0
        %1149 = vmatpush1.bf16.msra.mxu0 0
        %1150 = vmatprep.subr.bf16.mxu0 0
        %1151 = vmatpush1.bf16.msra.mxu0 0
        %1152 = vmatprep.mubr.bf16.mxu0 0
        %1153 = vmatmul.mubr.bf16.gmra.mrb[0].mxu0 %v1075
        %v1154 = vpop.f32.mrb[0].mxu0
        %v1155 = vadd.f32 %v1061, %v1154
        %v1156 = vpop.f32.mrb[0].mxu0
        %v1157 = vadd.f32 %v1061, %v1156
        %v1158 = vpop.f32.mrb[0].mxu0
        %v1159 = vadd.f32 %v1066, %v1158
        %v1160 = vpop.f32.mrb[0].mxu0
        %v1161 = vadd.f32 %v1066, %v1160
        %1162 = vdwg.mxu0
        %1163 = vmatprep.subr.bf16.mxu0 %v1013
        %1164 = vmatpush1.bf16.msra.mxu0 %v1012
        %1165 = vmatprep.subr.bf16.mxu0 %v1025
        %1166 = vmatpush1.bf16.msra.mxu0 %v1024
        %1167 = vmatprep.subr.bf16.mxu0 %v1037
        %1168 = vmatpush1.bf16.msra.mxu0 %v1036
        %1169 = vmatprep.subr.bf16.mxu0 %v1049
        %1170 = vmatpush1.bf16.msra.mxu0 %v1048
        %1171 = vmatprep.subr.bf16.mxu0 0
        %1172 = vmatpush1.bf16.msra.mxu0 0
        %1173 = vmatprep.subr.bf16.mxu0 0
        %1174 = vmatpush1.bf16.msra.mxu0 0
        %1175 = vmatprep.subr.bf16.mxu0 0
        %1176 = vmatpush1.bf16.msra.mxu0 0
        %1177 = vmatprep.subr.bf16.mxu0 0
        %1178 = vmatpush1.bf16.msra.mxu0 0
        %1179 = vmatprep.subr.bf16.mxu0 0
        %1180 = vmatpush1.bf16.msra.mxu0 0
        %1181 = vmatprep.subr.bf16.mxu0 0
        %1182 = vmatpush1.bf16.msra.mxu0 0
        %1183 = vmatprep.subr.bf16.mxu0 0
        %1184 = vmatpush1.bf16.msra.mxu0 0
        %1185 = vmatprep.subr.bf16.mxu0 0
        %1186 = vmatpush1.bf16.msra.mxu0 0
        %1187 = vmatprep.subr.bf16.mxu0 0
        %1188 = vmatpush1.bf16.msra.mxu0 0
        %1189 = vmatprep.subr.bf16.mxu0 0
        %1190 = vmatpush1.bf16.msra.mxu0 0
        %1191 = vmatprep.subr.bf16.mxu0 0
        %1192 = vmatpush1.bf16.msra.mxu0 0
        %1193 = vmatprep.subr.bf16.mxu0 0
        %1194 = vmatpush1.bf16.msra.mxu0 0
        %1195 = vmatprep.mubr.bf16.mxu0 0
        %1196 = vmatmul.mubr.bf16.gmra.mrb[0].mxu0 %v1075
        %v1197 = vpop.f32.mrb[0].mxu0
        %v1198 = vadd.f32 %v1061, %v1197
        %v1199 = vpop.f32.mrb[0].mxu0
        %v1200 = vadd.f32 %v1061, %v1199
        %v1201 = vpop.f32.mrb[0].mxu0
        %v1202 = vadd.f32 %v1066, %v1201
        %v1203 = vpop.f32.mrb[0].mxu0
        %v1204 = vadd.f32 %v1066, %v1203
        %1205 = vdwg.mxu0
        %1206 = vmatprep.subr.bf16.mxu0 %v1015
        %1207 = vmatpush1.bf16.msra.mxu0 %v1014
        %1208 = vmatprep.subr.bf16.mxu0 %v1027
        %1209 = vmatpush1.bf16.msra.mxu0 %v1026
        %1210 = vmatprep.subr.bf16.mxu0 %v1039
        %1211 = vmatpush1.bf16.msra.mxu0 %v1038
        %1212 = vmatprep.subr.bf16.mxu0 %v1051
        %1213 = vmatpush1.bf16.msra.mxu0 %v1050
        %1214 = vmatprep.subr.bf16.mxu0 0
        %1215 = vmatpush1.bf16.msra.mxu0 0
        %1216 = vmatprep.subr.bf16.mxu0 0
        %1217 = vmatpush1.bf16.msra.mxu0 0
        %1218 = vmatprep.subr.bf16.mxu0 0
        %1219 = vmatpush1.bf16.msra.mxu0 0
        %1220 = vmatprep.subr.bf16.mxu0 0
        %1221 = vmatpush1.bf16.msra.mxu0 0
        %1222 = vmatprep.subr.bf16.mxu0 0
        %1223 = vmatpush1.bf16.msra.mxu0 0
        %1224 = vmatprep.subr.bf16.mxu0 0
        %1225 = vmatpush1.bf16.msra.mxu0 0
        %1226 = vmatprep.subr.bf16.mxu0 0
        %1227 = vmatpush1.bf16.msra.mxu0 0
        %1228 = vmatprep.subr.bf16.mxu0 0
        %1229 = vmatpush1.bf16.msra.mxu0 0
        %1230 = vmatprep.subr.bf16.mxu0 0
        %1231 = vmatpush1.bf16.msra.mxu0 0
        %1232 = vmatprep.subr.bf16.mxu0 0
        %1233 = vmatpush1.bf16.msra.mxu0 0
        %1234 = vmatprep.subr.bf16.mxu0 0
        %1235 = vmatpush1.bf16.msra.mxu0 0
        %1236 = vmatprep.subr.bf16.mxu0 0
        %1237 = vmatpush1.bf16.msra.mxu0 0
        %1238 = vmatprep.mubr.bf16.mxu0 0
        %1239 = vmatmul.mubr.bf16.gmra.mrb[0].mxu0 %v1075
        %v1240 = vpop.f32.mrb[0].mxu0
        %v1241 = vadd.f32 %v1061, %v1240
        %v1242 = vpop.f32.mrb[0].mxu0
        %v1243 = vadd.f32 %v1061, %v1242
        %v1244 = vpop.f32.mrb[0].mxu0
        %v1245 = vadd.f32 %v1066, %v1244
        %v1246 = vpop.f32.mrb[0].mxu0
        %v1247 = vadd.f32 %v1066, %v1246
        %1248 = vdwg.mxu0
        %1249 = vmatprep.subr.bf16.mxu0 %v1017
        %1250 = vmatpush1.bf16.msra.mxu0 %v1016
        %1251 = vmatprep.subr.bf16.mxu0 %v1029
        %1252 = vmatpush1.bf16.msra.mxu0 %v1028
        %1253 = vmatprep.subr.bf16.mxu0 %v1041
        %1254 = vmatpush1.bf16.msra.mxu0 %v1040
        %1255 = vmatprep.subr.bf16.mxu0 %v1053
        %1256 = vmatpush1.bf16.msra.mxu0 %v1052
        %1257 = vmatprep.subr.bf16.mxu0 0
        %1258 = vmatpush1.bf16.msra.mxu0 0
        %1259 = vmatprep.subr.bf16.mxu0 0
        %1260 = vmatpush1.bf16.msra.mxu0 0
        %1261 = vmatprep.subr.bf16.mxu0 0
        %1262 = vmatpush1.bf16.msra.mxu0 0
        %1263 = vmatprep.subr.bf16.mxu0 0
        %1264 = vmatpush1.bf16.msra.mxu0 0
        %1265 = vmatprep.subr.bf16.mxu0 0
        %1266 = vmatpush1.bf16.msra.mxu0 0
        %1267 = vmatprep.subr.bf16.mxu0 0
        %1268 = vmatpush1.bf16.msra.mxu0 0
        %1269 = vmatprep.subr.bf16.mxu0 0
        %1270 = vmatpush1.bf16.msra.mxu0 0
        %1271 = vmatprep.subr.bf16.mxu0 0
        %1272 = vmatpush1.bf16.msra.mxu0 0
        %1273 = vmatprep.subr.bf16.mxu0 0
        %1274 = vmatpush1.bf16.msra.mxu0 0
        %1275 = vmatprep.subr.bf16.mxu0 0
        %1276 = vmatpush1.bf16.msra.mxu0 0
        %1277 = vmatprep.subr.bf16.mxu0 0
        %1278 = vmatpush1.bf16.msra.mxu0 0
        %1279 = vmatprep.subr.bf16.mxu0 0
        %1280 = vmatpush1.bf16.msra.mxu0 0
        %1281 = vmatprep.mubr.bf16.mxu0 0
        %1282 = vmatmul.mubr.bf16.gmra.mrb[0].mxu0 %v1075
        %v1283 = vpop.f32.mrb[0].mxu0
        %v1284 = vadd.f32 %v1061, %v1283
        %v1285 = vpop.f32.mrb[0].mxu0
        %v1286 = vadd.f32 %v1061, %v1285
        %v1287 = vpop.f32.mrb[0].mxu0
        %v1288 = vadd.f32 %v1066, %v1287
        %v1289 = vpop.f32.mrb[0].mxu0
        %v1290 = vadd.f32 %v1066, %v1289
        %1291 = vdwg.mxu0
        %1292 = vmatprep.subr.bf16.mxu0 %v1019
        %1293 = vmatpush1.bf16.msra.mxu0 %v1018
        %1294 = vmatprep.subr.bf16.mxu0 %v1031
        %1295 = vmatpush1.bf16.msra.mxu0 %v1030
        %1296 = vmatprep.subr.bf16.mxu0 %v1043
        %1297 = vmatpush1.bf16.msra.mxu0 %v1042
        %1298 = vmatprep.subr.bf16.mxu0 %v1055
        %1299 = vmatpush1.bf16.msra.mxu0 %v1054
        %1300 = vmatprep.subr.bf16.mxu0 0
        %1301 = vmatpush1.bf16.msra.mxu0 0
        %1302 = vmatprep.subr.bf16.mxu0 0
        %1303 = vmatpush1.bf16.msra.mxu0 0
        %1304 = vmatprep.subr.bf16.mxu0 0
        %1305 = vmatpush1.bf16.msra.mxu0 0
        %1306 = vmatprep.subr.bf16.mxu0 0
        %1307 = vmatpush1.bf16.msra.mxu0 0
        %1308 = vmatprep.subr.bf16.mxu0 0
        %1309 = vmatpush1.bf16.msra.mxu0 0
        %1310 = vmatprep.subr.bf16.mxu0 0
        %1311 = vmatpush1.bf16.msra.mxu0 0
        %1312 = vmatprep.subr.bf16.mxu0 0
        %1313 = vmatpush1.bf16.msra.mxu0 0
        %1314 = vmatprep.subr.bf16.mxu0 0
        %1315 = vmatpush1.bf16.msra.mxu0 0
        %1316 = vmatprep.subr.bf16.mxu0 0
        %1317 = vmatpush1.bf16.msra.mxu0 0
        %1318 = vmatprep.subr.bf16.mxu0 0
        %1319 = vmatpush1.bf16.msra.mxu0 0
        %1320 = vmatprep.subr.bf16.mxu0 0
        %1321 = vmatpush1.bf16.msra.mxu0 0
        %1322 = vmatprep.subr.bf16.mxu0 0
        %1323 = vmatpush1.bf16.msra.mxu0 0
        %1324 = vmatprep.mubr.bf16.mxu0 0
        %1325 = vmatmul.mubr.bf16.gmra.mrb[0].mxu0 %v1075
        %v1326 = vpop.f32.mrb[0].mxu0
        %v1327 = vadd.f32 %v1061, %v1326
        %v1328 = vpop.f32.mrb[0].mxu0
        %v1329 = vadd.f32 %v1061, %v1328
        %v1330 = vpop.f32.mrb[0].mxu0
        %v1331 = vadd.f32 %v1066, %v1330
        %v1332 = vpop.f32.mrb[0].mxu0
        %v1333 = vadd.f32 %v1066, %v1332
        %1334 = vdwg.mxu0
        %v1335 = vpack.c.bf16 %v1116, %v1112
        %v1336 = vpack.c.bf16 %v1118, %v1114
        %v1337 = vpack.c.bf16 %v1159, %v1155
        %v1338 = vpack.c.bf16 %v1161, %v1157
        %v1339 = vpack.c.bf16 %v1202, %v1198
        %v1340 = vpack.c.bf16 %v1204, %v1200
        %v1341 = vpack.c.bf16 %v1245, %v1241
        %v1342 = vpack.c.bf16 %v1247, %v1243
        %v1343 = vpack.c.bf16 %v1288, %v1284
        %v1344 = vpack.c.bf16 %v1290, %v1286
        %v1345 = vpack.c.bf16 %v1331, %v1327
        %v1346 = vpack.c.bf16 %v1333, %v1329
        %v1359 = vunpack.c.l.b16 %v1335
        %v1360 = vunpack.c.l.b16 %v1336
        %v1361 = vunpack.c.l.b16 %v1337
        %v1362 = vunpack.c.l.b16 %v1338
        %v1363 = vunpack.c.l.b16 %v1339
        %v1364 = vunpack.c.l.b16 %v1340
        %v1365 = vunpack.c.l.b16 %v1341
        %v1366 = vunpack.c.l.b16 %v1342
        %v1367 = vunpack.c.l.b16 %v1343
        %v1368 = vunpack.c.l.b16 %v1344
        %v1369 = vunpack.c.l.b16 %v1345
        %v1370 = vunpack.c.l.b16 %v1346
        %v1371 = vunpack.c.h.b16 %v1335
        %v1372 = vunpack.c.h.b16 %v1336
        %v1373 = vunpack.c.h.b16 %v1337
        %v1374 = vunpack.c.h.b16 %v1338
        %v1375 = vunpack.c.h.b16 %v1339
        %v1376 = vunpack.c.h.b16 %v1340
        %v1377 = vunpack.c.h.b16 %v1341
        %v1378 = vunpack.c.h.b16 %v1342
        %v1379 = vunpack.c.h.b16 %v1343
        %v1380 = vunpack.c.h.b16 %v1344
        %v1381 = vunpack.c.h.b16 %v1345
        %v1382 = vunpack.c.h.b16 %v1346
        %v1383 = vpack.c.b16 %v1360, %v1359
        %v1384 = vpack.c.b16 %v1362, %v1361
        %v1385 = vpack.c.b16 %v1364, %v1363
        %v1386 = vpack.c.b16 %v1366, %v1365
        %v1387 = vpack.c.b16 %v1368, %v1367
        %v1388 = vpack.c.b16 %v1370, %v1369
        %v1389 = vpack.c.b16 %v1372, %v1371
        %v1390 = vpack.c.b16 %v1374, %v1373
        %v1391 = vpack.c.b16 %v1376, %v1375
        %v1392 = vpack.c.b16 %v1378, %v1377
        %v1393 = vpack.c.b16 %v1380, %v1379
        %v1394 = vpack.c.b16 %v1382, %v1381
        %1407 = vst [vmem:[%s296] sm:$0xff] %v1383
        %1408 = vst [vmem:[%s296 + $0x8] sm:$0xff] %v1384
        %1409 = vst [vmem:[%s296 + $0x10] sm:$0xff] %v1385
        %1410 = vst [vmem:[%s296 + $0x18] sm:$0xff] %v1386
        %1411 = vst [vmem:[%s296 + $0x20] sm:$0xff] %v1387
        %1412 = vst [vmem:[%s296 + $0x28] sm:$0xff] %v1388
        %1413 = vst [vmem:[%s296 + $0x30] sm:$0xff] %v1389
        %1414 = vst [vmem:[%s296 + $0x38] sm:$0xff] %v1390
        %1415 = vst [vmem:[%s296 + $0x40] sm:$0xff] %v1391
        %1416 = vst [vmem:[%s296 + $0x48] sm:$0xff] %v1392
        %1417 = vst [vmem:[%s296 + $0x50] sm:$0xff] %v1393
        %1418 = vst [vmem:[%s296 + $0x58] sm:$0xff] %v1394
        %v1419 = vld [vmem:[%s306] sm:$0xff]
        %v1420 = vld [vmem:[%s306 + $0x8] sm:$0xf]
        %vm1421 = vcmp.ge.s32.totalorder %v1419, 0
        %vm1422 = vcmp.ge.s32.totalorder %v1420, 0
        %v1423 = vmax.f32 %v1112, %v1116
        %v1424 = vrot.slane %v1423, 4
        %v1425 = vmax.f32 %v1423, %v1424
        %v1426 = vrot.slane %v1425, 2
        %v1427 = vmax.f32 %v1425, %v1426
        %v1428 = vrot.slane %v1427, 1
        %v1429 = vmax.f32 %v1427, %v1428
        %v1430 = vmax.f32 %v1114, %v1118
        %v1431 = vrot.slane %v1430, 4
        %v1432 = vmax.f32 %v1430, %v1431
        %v1433 = vrot.slane %v1432, 2
        %v1434 = vmax.f32 %v1432, %v1433
        %v1435 = vrot.slane %v1434, 1
        %v1436 = vmax.f32 %v1434, %v1435
        %v1437 = vmax.f32 %v1155, %v1159
        %v1438 = vrot.slane %v1437, 4
        %v1439 = vmax.f32 %v1437, %v1438
        %v1440 = vrot.slane %v1439, 2
        %v1441 = vmax.f32 %v1439, %v1440
        %v1442 = vrot.slane %v1441, 1
        %v1443 = vmax.f32 %v1441, %v1442
        %v1444 = vmax.f32 %v1157, %v1161
        %v1445 = vrot.slane %v1444, 4
        %v1446 = vmax.f32 %v1444, %v1445
        %v1447 = vrot.slane %v1446, 2
        %v1448 = vmax.f32 %v1446, %v1447
        %v1449 = vrot.slane %v1448, 1
        %v1450 = vmax.f32 %v1448, %v1449
        %v1451 = vmax.f32 %v1198, %v1202
        %v1452 = vrot.slane %v1451, 4
        %v1453 = vmax.f32 %v1451, %v1452
        %v1454 = vrot.slane %v1453, 2
        %v1455 = vmax.f32 %v1453, %v1454
        %v1456 = vrot.slane %v1455, 1
        %v1457 = vmax.f32 %v1455, %v1456
        %v1458 = vmax.f32 %v1200, %v1204
        %v1459 = vrot.slane %v1458, 4
        %v1460 = vmax.f32 %v1458, %v1459
        %v1461 = vrot.slane %v1460, 2
        %v1462 = vmax.f32 %v1460, %v1461
        %v1463 = vrot.slane %v1462, 1
        %v1464 = vmax.f32 %v1462, %v1463
        %v1465 = vmax.f32 %v1241, %v1245
        %v1466 = vrot.slane %v1465, 4
        %v1467 = vmax.f32 %v1465, %v1466
        %v1468 = vrot.slane %v1467, 2
        %v1469 = vmax.f32 %v1467, %v1468
        %v1470 = vrot.slane %v1469, 1
        %v1471 = vmax.f32 %v1469, %v1470
        %v1472 = vmax.f32 %v1243, %v1247
        %v1473 = vrot.slane %v1472, 4
        %v1474 = vmax.f32 %v1472, %v1473
        %v1475 = vrot.slane %v1474, 2
        %v1476 = vmax.f32 %v1474, %v1475
        %v1477 = vrot.slane %v1476, 1
        %v1478 = vmax.f32 %v1476, %v1477
        %v1479 = vmax.f32 %v1284, %v1288
        %v1480 = vrot.slane %v1479, 4
        %v1481 = vmax.f32 %v1479, %v1480
        %v1482 = vrot.slane %v1481, 2
        %v1483 = vmax.f32 %v1481, %v1482
        %v1484 = vrot.slane %v1483, 1
        %v1485 = vmax.f32 %v1483, %v1484
        %v1486 = vmax.f32 %v1286, %v1290
        %v1487 = vrot.slane %v1486, 4
        %v1488 = vmax.f32 %v1486, %v1487
        %v1489 = vrot.slane %v1488, 2
        %v1490 = vmax.f32 %v1488, %v1489
        %v1491 = vrot.slane %v1490, 1
        %v1492 = vmax.f32 %v1490, %v1491
        %v1493 = vmax.f32 %v1327, %v1331
        %v1494 = vrot.slane %v1493, 4
        %v1495 = vmax.f32 %v1493, %v1494
        %v1496 = vrot.slane %v1495, 2
        %v1497 = vmax.f32 %v1495, %v1496
        %v1498 = vrot.slane %v1497, 1
        %v1499 = vmax.f32 %v1497, %v1498
        %v1500 = vmax.f32 %v1329, %v1333
        %v1501 = vrot.slane %v1500, 4
        %v1502 = vmax.f32 %v1500, %v1501
        %v1503 = vrot.slane %v1502, 2
        %v1504 = vmax.f32 %v1502, %v1503
        %v1505 = vrot.slane %v1504, 1
        %v1506 = vmax.f32 %v1504, %v1505
        %v1507 = vsub.f32 %v1112, %v1429
        %v1508 = vsub.f32 %v1114, %v1436
        %v1509 = vsub.f32 %v1155, %v1443
        %v1510 = vsub.f32 %v1157, %v1450
        %v1511 = vsub.f32 %v1198, %v1457
        %v1512 = vsub.f32 %v1200, %v1464
        %v1513 = vsub.f32 %v1241, %v1471
        %v1514 = vsub.f32 %v1243, %v1478
        %v1515 = vsub.f32 %v1284, %v1485
        %v1516 = vsub.f32 %v1286, %v1492
        %v1517 = vsub.f32 %v1327, %v1499
        %v1518 = vsub.f32 %v1329, %v1506
        %v1519 = vsub.f32 %v1116, %v1429
        %v1520 = vsub.f32 %v1118, %v1436
        %v1521 = vsub.f32 %v1159, %v1443
        %v1522 = vsub.f32 %v1161, %v1450
        %v1523 = vsub.f32 %v1202, %v1457
        %v1524 = vsub.f32 %v1204, %v1464
        %v1525 = vsub.f32 %v1245, %v1471
        %v1526 = vsub.f32 %v1247, %v1478
        %v1527 = vsub.f32 %v1288, %v1485
        %v1528 = vsub.f32 %v1290, %v1492
        %v1529 = vsub.f32 %v1331, %v1499
        %v1530 = vsub.f32 %v1333, %v1506
        %v1531 = vmul.f32 %v1507, 1.442695
        %v1532 = vpow.pop %v1531
        %v1533 = vmul.f32 %v1508, 1.442695
        %v1534 = vpow.pop %v1533
        %v1535 = vmul.f32 %v1509, 1.442695
        %v1536 = vpow.pop %v1535
        %v1537 = vmul.f32 %v1510, 1.442695
        %v1538 = vpow.pop %v1537
        %v1539 = vmul.f32 %v1511, 1.442695
        %v1540 = vpow.pop %v1539
        %v1541 = vmul.f32 %v1512, 1.442695
        %v1542 = vpow.pop %v1541
        %v1543 = vmul.f32 %v1513, 1.442695
        %v1544 = vpow.pop %v1543
        %v1545 = vmul.f32 %v1514, 1.442695
        %v1546 = vpow.pop %v1545
        %v1547 = vmul.f32 %v1515, 1.442695
        %v1548 = vpow.pop %v1547
        %v1549 = vmul.f32 %v1516, 1.442695
        %v1550 = vpow.pop %v1549
        %v1551 = vmul.f32 %v1517, 1.442695
        %v1552 = vpow.pop %v1551
        %v1553 = vmul.f32 %v1518, 1.442695
        %v1554 = vpow.pop %v1553
        %v1555 = vmul.f32 %v1519, 1.442695
        %v1556 = vpow.pop %v1555
        %v1557 = vmul.f32 %v1520, 1.442695
        %v1558 = vpow.pop %v1557
        %v1559 = vmul.f32 %v1521, 1.442695
        %v1560 = vpow.pop %v1559
        %v1561 = vmul.f32 %v1522, 1.442695
        %v1562 = vpow.pop %v1561
        %v1563 = vmul.f32 %v1523, 1.442695
        %v1564 = vpow.pop %v1563
        %v1565 = vmul.f32 %v1524, 1.442695
        %v1566 = vpow.pop %v1565
        %v1567 = vmul.f32 %v1525, 1.442695
        %v1568 = vpow.pop %v1567
        %v1569 = vmul.f32 %v1526, 1.442695
        %v1570 = vpow.pop %v1569
        %v1571 = vmul.f32 %v1527, 1.442695
        %v1572 = vpow.pop %v1571
        %v1573 = vmul.f32 %v1528, 1.442695
        %v1574 = vpow.pop %v1573
        %v1575 = vmul.f32 %v1529, 1.442695
        %v1576 = vpow.pop %v1575
        %v1577 = vmul.f32 %v1530, 1.442695
        %v1578 = vpow.pop %v1577
        %v1579 = vadd.f32 %v1532, %v1556
        %v1580 = vrot.slane %v1579, 4
        %v1581 = vadd.f32 %v1579, %v1580
        %v1582 = vrot.slane %v1581, 2
        %v1583 = vadd.f32 %v1581, %v1582
        %v1584 = vrot.slane %v1583, 1
        %v1585 = vadd.f32 %v1583, %v1584
        %v1586 = vadd.f32 %v1534, %v1558
        %v1587 = vrot.slane %v1586, 4
        %v1588 = vadd.f32 %v1586, %v1587
        %v1589 = vrot.slane %v1588, 2
        %v1590 = vadd.f32 %v1588, %v1589
        %v1591 = vrot.slane %v1590, 1
        %v1592 = vadd.f32 %v1590, %v1591
        %v1593 = vadd.f32 %v1536, %v1560
        %v1594 = vrot.slane %v1593, 4
        %v1595 = vadd.f32 %v1593, %v1594
        %v1596 = vrot.slane %v1595, 2
        %v1597 = vadd.f32 %v1595, %v1596
        %v1598 = vrot.slane %v1597, 1
        %v1599 = vadd.f32 %v1597, %v1598
        %v1600 = vadd.f32 %v1538, %v1562
        %v1601 = vrot.slane %v1600, 4
        %v1602 = vadd.f32 %v1600, %v1601
        %v1603 = vrot.slane %v1602, 2
        %v1604 = vadd.f32 %v1602, %v1603
        %v1605 = vrot.slane %v1604, 1
        %v1606 = vadd.f32 %v1604, %v1605
        %v1607 = vadd.f32 %v1540, %v1564
        %v1608 = vrot.slane %v1607, 4
        %v1609 = vadd.f32 %v1607, %v1608
        %v1610 = vrot.slane %v1609, 2
        %v1611 = vadd.f32 %v1609, %v1610
        %v1612 = vrot.slane %v1611, 1
        %v1613 = vadd.f32 %v1611, %v1612
        %v1614 = vadd.f32 %v1542, %v1566
        %v1615 = vrot.slane %v1614, 4
        %v1616 = vadd.f32 %v1614, %v1615
        %v1617 = vrot.slane %v1616, 2
        %v1618 = vadd.f32 %v1616, %v1617
        %v1619 = vrot.slane %v1618, 1
        %v1620 = vadd.f32 %v1618, %v1619
        %v1621 = vadd.f32 %v1544, %v1568
        %v1622 = vrot.slane %v1621, 4
        %v1623 = vadd.f32 %v1621, %v1622
        %v1624 = vrot.slane %v1623, 2
        %v1625 = vadd.f32 %v1623, %v1624
        %v1626 = vrot.slane %v1625, 1
        %v1627 = vadd.f32 %v1625, %v1626
        %v1628 = vadd.f32 %v1546, %v1570
        %v1629 = vrot.slane %v1628, 4
        %v1630 = vadd.f32 %v1628, %v1629
        %v1631 = vrot.slane %v1630, 2
        %v1632 = vadd.f32 %v1630, %v1631
        %v1633 = vrot.slane %v1632, 1
        %v1634 = vadd.f32 %v1632, %v1633
        %v1635 = vadd.f32 %v1548, %v1572
        %v1636 = vrot.slane %v1635, 4
        %v1637 = vadd.f32 %v1635, %v1636
        %v1638 = vrot.slane %v1637, 2
        %v1639 = vadd.f32 %v1637, %v1638
        %v1640 = vrot.slane %v1639, 1
        %v1641 = vadd.f32 %v1639, %v1640
        %v1642 = vadd.f32 %v1550, %v1574
        %v1643 = vrot.slane %v1642, 4
        %v1644 = vadd.f32 %v1642, %v1643
        %v1645 = vrot.slane %v1644, 2
        %v1646 = vadd.f32 %v1644, %v1645
        %v1647 = vrot.slane %v1646, 1
        %v1648 = vadd.f32 %v1646, %v1647
        %v1649 = vadd.f32 %v1552, %v1576
        %v1650 = vrot.slane %v1649, 4
        %v1651 = vadd.f32 %v1649, %v1650
        %v1652 = vrot.slane %v1651, 2
        %v1653 = vadd.f32 %v1651, %v1652
        %v1654 = vrot.slane %v1653, 1
        %v1655 = vadd.f32 %v1653, %v1654
        %v1656 = vadd.f32 %v1554, %v1578
        %v1657 = vrot.slane %v1656, 4
        %v1658 = vadd.f32 %v1656, %v1657
        %v1659 = vrot.slane %v1658, 2
        %v1660 = vadd.f32 %v1658, %v1659
        %v1661 = vrot.slane %v1660, 1
        %v1662 = vadd.f32 %v1660, %v1661
        %v1663 = vlog2.pop %v1585
        %v1664 = vmul.f32 %v1663, 0.6931472
        %v1665 = vlog2.pop %v1592
        %v1666 = vmul.f32 %v1665, 0.6931472
        %v1667 = vlog2.pop %v1599
        %v1668 = vmul.f32 %v1667, 0.6931472
        %v1669 = vlog2.pop %v1606
        %v1670 = vmul.f32 %v1669, 0.6931472
        %v1671 = vlog2.pop %v1613
        %v1672 = vmul.f32 %v1671, 0.6931472
        %v1673 = vlog2.pop %v1620
        %v1674 = vmul.f32 %v1673, 0.6931472
        %v1675 = vlog2.pop %v1627
        %v1676 = vmul.f32 %v1675, 0.6931472
        %v1677 = vlog2.pop %v1634
        %v1678 = vmul.f32 %v1677, 0.6931472
        %v1679 = vlog2.pop %v1641
        %v1680 = vmul.f32 %v1679, 0.6931472
        %v1681 = vlog2.pop %v1648
        %v1682 = vmul.f32 %v1681, 0.6931472
        %v1683 = vlog2.pop %v1655
        %v1684 = vmul.f32 %v1683, 0.6931472
        %v1685 = vlog2.pop %v1662
        %v1686 = vmul.f32 %v1685, 0.6931472
        %v1687 = vadd.f32 %v1664, %v1429
        %v1688 = vadd.f32 %v1666, %v1436
        %v1689 = vadd.f32 %v1668, %v1443
        %v1690 = vadd.f32 %v1670, %v1450
        %v1691 = vadd.f32 %v1672, %v1457
        %v1692 = vadd.f32 %v1674, %v1464
        %v1693 = vadd.f32 %v1676, %v1471
        %v1694 = vadd.f32 %v1678, %v1478
        %v1695 = vadd.f32 %v1680, %v1485
        %v1696 = vadd.f32 %v1682, %v1492
        %v1697 = vadd.f32 %v1684, %v1499
        %v1698 = vadd.f32 %v1686, %v1506
        %v1699 = vlaneseq
        %v1700 = vshrl.u32 %v1699, 7
        %v1701 = vadd.s32 %v1700, 8
        %v1702 = vlaneseq
        %v1703 = vshrl.u32 %v1702, 7
        %v1704 = vsub.s32 0, %v1703
        %v1705 = vrot.slane %v1419, %v1704
        %v1706 = vlaneseq
        %v1707 = vshrl.u32 %v1706, 7
        %v1708 = vsub.s32 1, %v1707
        %v1709 = vrot.slane %v1419, %v1708
        %v1710 = vlaneseq
        %v1711 = vshrl.u32 %v1710, 7
        %v1712 = vsub.s32 2, %v1711
        %v1713 = vrot.slane %v1419, %v1712
        %v1714 = vlaneseq
        %v1715 = vshrl.u32 %v1714, 7
        %v1716 = vsub.s32 3, %v1715
        %v1717 = vrot.slane %v1419, %v1716
        %v1718 = vlaneseq
        %v1719 = vshrl.u32 %v1718, 7
        %v1720 = vsub.s32 4, %v1719
        %v1721 = vrot.slane %v1419, %v1720
        %v1722 = vlaneseq
        %v1723 = vshrl.u32 %v1722, 7
        %v1724 = vsub.s32 5, %v1723
        %v1725 = vrot.slane %v1419, %v1724
        %v1726 = vlaneseq
        %v1727 = vshrl.u32 %v1726, 7
        %v1728 = vsub.s32 6, %v1727
        %v1729 = vrot.slane %v1419, %v1728
        %v1730 = vlaneseq
        %v1731 = vshrl.u32 %v1730, 7
        %v1732 = vsub.s32 7, %v1731
        %v1733 = vrot.slane %v1419, %v1732
        %v1734 = vlaneseq
        %v1735 = vshrl.u32 %v1734, 7
        %v1736 = vsub.s32 0, %v1735
        %v1737 = vrot.slane %v1420, %v1736
        %v1738 = vlaneseq
        %v1739 = vshrl.u32 %v1738, 7
        %v1740 = vsub.s32 1, %v1739
        %v1741 = vrot.slane %v1420, %v1740
        %v1742 = vlaneseq
        %v1743 = vshrl.u32 %v1742, 7
        %v1744 = vsub.s32 2, %v1743
        %v1745 = vrot.slane %v1420, %v1744
        %v1746 = vlaneseq
        %v1747 = vshrl.u32 %v1746, 7
        %v1748 = vsub.s32 3, %v1747
        %v1749 = vrot.slane %v1420, %v1748
        %vm1750 = vcmp.eq.s32.totalorder %v1700, %v1705
        %vm1751 = vcmp.eq.s32.totalorder %v1700, %v1709
        %vm1752 = vcmp.eq.s32.totalorder %v1700, %v1713
        %vm1753 = vcmp.eq.s32.totalorder %v1700, %v1717
        %vm1754 = vcmp.eq.s32.totalorder %v1700, %v1721
        %vm1755 = vcmp.eq.s32.totalorder %v1700, %v1725
        %vm1756 = vcmp.eq.s32.totalorder %v1700, %v1729
        %vm1757 = vcmp.eq.s32.totalorder %v1700, %v1733
        %vm1758 = vcmp.eq.s32.totalorder %v1700, %v1737
        %vm1759 = vcmp.eq.s32.totalorder %v1700, %v1741
        %vm1760 = vcmp.eq.s32.totalorder %v1700, %v1745
        %vm1761 = vcmp.eq.s32.totalorder %v1700, %v1749
        %vm1762 = vcmp.eq.s32.totalorder %v1701, %v1705
        %vm1763 = vcmp.eq.s32.totalorder %v1701, %v1709
        %vm1764 = vcmp.eq.s32.totalorder %v1701, %v1713
        %vm1765 = vcmp.eq.s32.totalorder %v1701, %v1717
        %vm1766 = vcmp.eq.s32.totalorder %v1701, %v1721
        %vm1767 = vcmp.eq.s32.totalorder %v1701, %v1725
        %vm1768 = vcmp.eq.s32.totalorder %v1701, %v1729
        %vm1769 = vcmp.eq.s32.totalorder %v1701, %v1733
        %vm1770 = vcmp.eq.s32.totalorder %v1701, %v1737
        %vm1771 = vcmp.eq.s32.totalorder %v1701, %v1741
        %vm1772 = vcmp.eq.s32.totalorder %v1701, %v1745
        %vm1773 = vcmp.eq.s32.totalorder %v1701, %v1749
        %v1774 = vsel %vm1750, %v1112, 0.0
        %v1775 = vsel %vm1751, %v1114, 0.0
        %v1776 = vsel %vm1752, %v1155, 0.0
        %v1777 = vsel %vm1753, %v1157, 0.0
        %v1778 = vsel %vm1754, %v1198, 0.0
        %v1779 = vsel %vm1755, %v1200, 0.0
        %v1780 = vsel %vm1756, %v1241, 0.0
        %v1781 = vsel %vm1757, %v1243, 0.0
        %v1782 = vsel %vm1758, %v1284, 0.0
        %v1783 = vsel %vm1759, %v1286, 0.0
        %v1784 = vsel %vm1760, %v1327, 0.0
        %v1785 = vsel %vm1761, %v1329, 0.0
        %v1786 = vsel %vm1762, %v1116, 0.0
        %v1787 = vsel %vm1763, %v1118, 0.0
        %v1788 = vsel %vm1764, %v1159, 0.0
        %v1789 = vsel %vm1765, %v1161, 0.0
        %v1790 = vsel %vm1766, %v1202, 0.0
        %v1791 = vsel %vm1767, %v1204, 0.0
        %v1792 = vsel %vm1768, %v1245, 0.0
        %v1793 = vsel %vm1769, %v1247, 0.0
        %v1794 = vsel %vm1770, %v1288, 0.0
        %v1795 = vsel %vm1771, %v1290, 0.0
        %v1796 = vsel %vm1772, %v1331, 0.0
        %v1797 = vsel %vm1773, %v1333, 0.0
        %v1798 = vadd.f32 %v1774, %v1786
        %v1799 = vrot.slane %v1798, 4
        %v1800 = vadd.f32 %v1798, %v1799
        %v1801 = vrot.slane %v1800, 2
        %v1802 = vadd.f32 %v1800, %v1801
        %v1803 = vrot.slane %v1802, 1
        %v1804 = vadd.f32 %v1802, %v1803
        %v1805 = vadd.f32 %v1775, %v1787
        %v1806 = vrot.slane %v1805, 4
        %v1807 = vadd.f32 %v1805, %v1806
        %v1808 = vrot.slane %v1807, 2
        %v1809 = vadd.f32 %v1807, %v1808
        %v1810 = vrot.slane %v1809, 1
        %v1811 = vadd.f32 %v1809, %v1810
        %v1812 = vadd.f32 %v1776, %v1788
        %v1813 = vrot.slane %v1812, 4
        %v1814 = vadd.f32 %v1812, %v1813
        %v1815 = vrot.slane %v1814, 2
        %v1816 = vadd.f32 %v1814, %v1815
        %v1817 = vrot.slane %v1816, 1
        %v1818 = vadd.f32 %v1816, %v1817
        %v1819 = vadd.f32 %v1777, %v1789
        %v1820 = vrot.slane %v1819, 4
        %v1821 = vadd.f32 %v1819, %v1820
        %v1822 = vrot.slane %v1821, 2
        %v1823 = vadd.f32 %v1821, %v1822
        %v1824 = vrot.slane %v1823, 1
        %v1825 = vadd.f32 %v1823, %v1824
        %v1826 = vadd.f32 %v1778, %v1790
        %v1827 = vrot.slane %v1826, 4
        %v1828 = vadd.f32 %v1826, %v1827
        %v1829 = vrot.slane %v1828, 2
        %v1830 = vadd.f32 %v1828, %v1829
        %v1831 = vrot.slane %v1830, 1
        %v1832 = vadd.f32 %v1830, %v1831
        %v1833 = vadd.f32 %v1779, %v1791
        %v1834 = vrot.slane %v1833, 4
        %v1835 = vadd.f32 %v1833, %v1834
        %v1836 = vrot.slane %v1835, 2
        %v1837 = vadd.f32 %v1835, %v1836
        %v1838 = vrot.slane %v1837, 1
        %v1839 = vadd.f32 %v1837, %v1838
        %v1840 = vadd.f32 %v1780, %v1792
        %v1841 = vrot.slane %v1840, 4
        %v1842 = vadd.f32 %v1840, %v1841
        %v1843 = vrot.slane %v1842, 2
        %v1844 = vadd.f32 %v1842, %v1843
        %v1845 = vrot.slane %v1844, 1
        %v1846 = vadd.f32 %v1844, %v1845
        %v1847 = vadd.f32 %v1781, %v1793
        %v1848 = vrot.slane %v1847, 4
        %v1849 = vadd.f32 %v1847, %v1848
        %v1850 = vrot.slane %v1849, 2
        %v1851 = vadd.f32 %v1849, %v1850
        %v1852 = vrot.slane %v1851, 1
        %v1853 = vadd.f32 %v1851, %v1852
        %v1854 = vadd.f32 %v1782, %v1794
        %v1855 = vrot.slane %v1854, 4
        %v1856 = vadd.f32 %v1854, %v1855
        %v1857 = vrot.slane %v1856, 2
        %v1858 = vadd.f32 %v1856, %v1857
        %v1859 = vrot.slane %v1858, 1
        %v1860 = vadd.f32 %v1858, %v1859
        %v1861 = vadd.f32 %v1783, %v1795
        %v1862 = vrot.slane %v1861, 4
        %v1863 = vadd.f32 %v1861, %v1862
        %v1864 = vrot.slane %v1863, 2
        %v1865 = vadd.f32 %v1863, %v1864
        %v1866 = vrot.slane %v1865, 1
        %v1867 = vadd.f32 %v1865, %v1866
        %v1868 = vadd.f32 %v1784, %v1796
        %v1869 = vrot.slane %v1868, 4
        %v1870 = vadd.f32 %v1868, %v1869
        %v1871 = vrot.slane %v1870, 2
        %v1872 = vadd.f32 %v1870, %v1871
        %v1873 = vrot.slane %v1872, 1
        %v1874 = vadd.f32 %v1872, %v1873
        %v1875 = vadd.f32 %v1785, %v1797
        %v1876 = vrot.slane %v1875, 4
        %v1877 = vadd.f32 %v1875, %v1876
        %v1878 = vrot.slane %v1877, 2
        %v1879 = vadd.f32 %v1877, %v1878
        %v1880 = vrot.slane %v1879, 1
        %v1881 = vadd.f32 %v1879, %v1880
        %v1882 = vsub.f32 %v1687, %v1804
        %v1883 = vsub.f32 %v1688, %v1811
        %v1884 = vsub.f32 %v1689, %v1818
        %v1885 = vsub.f32 %v1690, %v1825
        %v1886 = vsub.f32 %v1691, %v1832
        %v1887 = vsub.f32 %v1692, %v1839
        %v1888 = vsub.f32 %v1693, %v1846
        %v1889 = vsub.f32 %v1694, %v1853
        %v1890 = vsub.f32 %v1695, %v1860
        %v1891 = vsub.f32 %v1696, %v1867
        %v1892 = vsub.f32 %v1697, %v1874
        %v1893 = vsub.f32 %v1698, %v1881
        %v1906 = vcombine.low %v1882, %v1883
        %v1907 = vcombine.low %v1884, %v1885
        %v1908 = vcombine.low %v1886, %v1887
        %v1909 = vcombine.low %v1888, %v1889
        %v1911 = vunpack.c.l.s4 1966171168
        %v1912 = vunpack.c.0.s8 %v1911
        %v1913 = vlaneseq
        %v1914 = vshrl.u32 %v1913, 7
        %v1915 = vsub.s32 %v1912, %v1914
        %v1916 = vrot.slane %v1906, %v1915
        %v1918 = vunpack.c.l.s4 1966171168
        %v1919 = vunpack.c.0.s8 %v1918
        %v1920 = vlaneseq
        %v1921 = vshrl.u32 %v1920, 7
        %v1922 = vsub.s32 %v1919, %v1921
        %v1923 = vrot.slane %v1907, %v1922
        %v1925 = vunpack.c.l.s4 1966171168
        %v1926 = vunpack.c.0.s8 %v1925
        %v1927 = vlaneseq
        %v1928 = vshrl.u32 %v1927, 7
        %v1929 = vsub.s32 %v1926, %v1928
        %v1930 = vrot.slane %v1908, %v1929
        %v1932 = vunpack.c.l.s4 1966171168
        %v1933 = vunpack.c.0.s8 %v1932
        %v1934 = vlaneseq
        %v1935 = vshrl.u32 %v1934, 7
        %v1936 = vsub.s32 %v1933, %v1935
        %v1937 = vrot.slane %v1909, %v1936
        %v1938 = vcombine.low %v1916, %v1923
        %v1939 = vcombine.low %v1930, %v1937
        %v1941 = vunpack.c.l.s4 1966171168
        %v1942 = vunpack.c.0.s8 %v1941
        %v1943 = vlaneseq
        %v1944 = vshrl.u32 %v1943, 7
        %v1945 = vsub.s32 %v1942, %v1944
        %v1946 = vrot.slane %v1938, %v1945
        %v1948 = vunpack.c.l.s4 1966171168
        %v1949 = vunpack.c.0.s8 %v1948
        %v1950 = vlaneseq
        %v1951 = vshrl.u32 %v1950, 7
        %v1952 = vsub.s32 %v1949, %v1951
        %v1953 = vrot.slane %v1939, %v1952
        %v1954 = vcombine.low %v1946, %v1953
        %v1955 = vcombine.low %v1890, %v1891
        %v1956 = vcombine.low %v1892, %v1893
        %v1958 = vunpack.c.l.s4 1966171168
        %v1959 = vunpack.c.0.s8 %v1958
        %v1960 = vlaneseq
        %v1961 = vshrl.u32 %v1960, 7
        %v1962 = vsub.s32 %v1959, %v1961
        %v1963 = vrot.slane %v1955, %v1962
        %v1965 = vunpack.c.l.s4 1966171168
        %v1966 = vunpack.c.0.s8 %v1965
        %v1967 = vlaneseq
        %v1968 = vshrl.u32 %v1967, 7
        %v1969 = vsub.s32 %v1966, %v1968
        %v1970 = vrot.slane %v1956, %v1969
        %v1971 = vcombine.low %v1963, %v1970
        %v1973 = vunpack.c.l.s4 1966171168
        %v1974 = vunpack.c.0.s8 %v1973
        %v1975 = vlaneseq
        %v1976 = vshrl.u32 %v1975, 7
        %v1977 = vsub.s32 %v1974, %v1976
        %v1978 = vrot.slane %v1971, %v1977
        %v1981 = vsel %vm1421, %v1954, 0.0
        %v1982 = vsel %vm1422, %v1978, 0.0
        %v1985 = vlaneseq
        %v1986 = vshrl.u32 %v1985, 7
        %v1987 = vsub.s32 0, %v1986
        %v1988 = vrot.slane %v1981, %v1987
        %v1989 = vlaneseq
        %v1990 = vshrl.u32 %v1989, 7
        %v1991 = vsub.s32 1, %v1990
        %v1992 = vrot.slane %v1981, %v1991
        %v1993 = vlaneseq
        %v1994 = vshrl.u32 %v1993, 7
        %v1995 = vsub.s32 2, %v1994
        %v1996 = vrot.slane %v1981, %v1995
        %v1997 = vlaneseq
        %v1998 = vshrl.u32 %v1997, 7
        %v1999 = vsub.s32 3, %v1998
        %v2000 = vrot.slane %v1981, %v1999
        %v2001 = vlaneseq
        %v2002 = vshrl.u32 %v2001, 7
        %v2003 = vsub.s32 4, %v2002
        %v2004 = vrot.slane %v1981, %v2003
        %v2005 = vlaneseq
        %v2006 = vshrl.u32 %v2005, 7
        %v2007 = vsub.s32 5, %v2006
        %v2008 = vrot.slane %v1981, %v2007
        %v2009 = vlaneseq
        %v2010 = vshrl.u32 %v2009, 7
        %v2011 = vsub.s32 6, %v2010
        %v2012 = vrot.slane %v1981, %v2011
        %v2013 = vlaneseq
        %v2014 = vshrl.u32 %v2013, 7
        %v2015 = vsub.s32 7, %v2014
        %v2016 = vrot.slane %v1981, %v2015
        %v2017 = vlaneseq
        %v2018 = vshrl.u32 %v2017, 7
        %v2019 = vsub.s32 0, %v2018
        %v2020 = vrot.slane %v1982, %v2019
        %v2021 = vlaneseq
        %v2022 = vshrl.u32 %v2021, 7
        %v2023 = vsub.s32 1, %v2022
        %v2024 = vrot.slane %v1982, %v2023
        %v2025 = vlaneseq
        %v2026 = vshrl.u32 %v2025, 7
        %v2027 = vsub.s32 2, %v2026
        %v2028 = vrot.slane %v1982, %v2027
        %v2029 = vlaneseq
        %v2030 = vshrl.u32 %v2029, 7
        %v2031 = vsub.s32 3, %v2030
        %v2032 = vrot.slane %v1982, %v2031
        %vm2045 = vcmask 1040384
        %v2046 = vsel %vm2045, %v1988, 0.0
        %v2047 = vsel %vm2045, %v1992, 0.0
        %v2048 = vadd.f32 %v2046, %v2047
        %v2049 = vsel %vm2045, %v1996, 0.0
        %v2050 = vadd.f32 %v2048, %v2049
        %v2051 = vsel %vm2045, %v2000, 0.0
        %v2052 = vadd.f32 %v2050, %v2051
        %v2053 = vsel %vm2045, %v2004, 0.0
        %v2054 = vadd.f32 %v2052, %v2053
        %v2055 = vsel %vm2045, %v2008, 0.0
        %v2056 = vadd.f32 %v2054, %v2055
        %v2057 = vsel %vm2045, %v2012, 0.0
        %v2058 = vadd.f32 %v2056, %v2057
        %v2059 = vsel %vm2045, %v2016, 0.0
        %v2060 = vadd.f32 %v2058, %v2059
        %v2061 = vsel %vm2045, %v2020, 0.0
        %v2062 = vadd.f32 %v2060, %v2061
        %v2063 = vsel %vm2045, %v2024, 0.0
        %v2064 = vadd.f32 %v2062, %v2063
        %v2065 = vsel %vm2045, %v2028, 0.0
        %v2066 = vadd.f32 %v2064, %v2065
        %v2067 = vsel %vm2045, %v2032, 0.0
        %v2068 = vadd.f32 %v2066, %v2067
        %2069 = vadd.xlane.f32.xlu0 %v2068
        %v2070 = vpop.xlane.xlu0 %2069
        %v2071 = vsel %vm1421, 1, 0
        %v2072 = vsel %vm1422, 1, 0
        %v2073 = vcvt.s32.f32 %v2071
        %v2074 = vcvt.s32.f32 %v2072
        %v2077 = vlaneseq
        %v2078 = vshrl.u32 %v2077, 7
        %v2079 = vsub.s32 0, %v2078
        %v2080 = vrot.slane %v2073, %v2079
        %v2081 = vlaneseq
        %v2082 = vshrl.u32 %v2081, 7
        %v2083 = vsub.s32 1, %v2082
        %v2084 = vrot.slane %v2073, %v2083
        %v2085 = vlaneseq
        %v2086 = vshrl.u32 %v2085, 7
        %v2087 = vsub.s32 2, %v2086
        %v2088 = vrot.slane %v2073, %v2087
        %v2089 = vlaneseq
        %v2090 = vshrl.u32 %v2089, 7
        %v2091 = vsub.s32 3, %v2090
        %v2092 = vrot.slane %v2073, %v2091
        %v2093 = vlaneseq
        %v2094 = vshrl.u32 %v2093, 7
        %v2095 = vsub.s32 4, %v2094
        %v2096 = vrot.slane %v2073, %v2095
        %v2097 = vlaneseq
        %v2098 = vshrl.u32 %v2097, 7
        %v2099 = vsub.s32 5, %v2098
        %v2100 = vrot.slane %v2073, %v2099
        %v2101 = vlaneseq
        %v2102 = vshrl.u32 %v2101, 7
        %v2103 = vsub.s32 6, %v2102
        %v2104 = vrot.slane %v2073, %v2103
        %v2105 = vlaneseq
        %v2106 = vshrl.u32 %v2105, 7
        %v2107 = vsub.s32 7, %v2106
        %v2108 = vrot.slane %v2073, %v2107
        %v2109 = vlaneseq
        %v2110 = vshrl.u32 %v2109, 7
        %v2111 = vsub.s32 0, %v2110
        %v2112 = vrot.slane %v2074, %v2111
        %v2113 = vlaneseq
        %v2114 = vshrl.u32 %v2113, 7
        %v2115 = vsub.s32 1, %v2114
        %v2116 = vrot.slane %v2074, %v2115
        %v2117 = vlaneseq
        %v2118 = vshrl.u32 %v2117, 7
        %v2119 = vsub.s32 2, %v2118
        %v2120 = vrot.slane %v2074, %v2119
        %v2121 = vlaneseq
        %v2122 = vshrl.u32 %v2121, 7
        %v2123 = vsub.s32 3, %v2122
        %v2124 = vrot.slane %v2074, %v2123
        %v2137 = vsel %vm2045, %v2080, 0.0
        %v2138 = vsel %vm2045, %v2084, 0.0
        %v2139 = vadd.f32 %v2137, %v2138
        %v2140 = vsel %vm2045, %v2088, 0.0
        %v2141 = vadd.f32 %v2139, %v2140
        %v2142 = vsel %vm2045, %v2092, 0.0
        %v2143 = vadd.f32 %v2141, %v2142
        %v2144 = vsel %vm2045, %v2096, 0.0
        %v2145 = vadd.f32 %v2143, %v2144
        %v2146 = vsel %vm2045, %v2100, 0.0
        %v2147 = vadd.f32 %v2145, %v2146
        %v2148 = vsel %vm2045, %v2104, 0.0
        %v2149 = vadd.f32 %v2147, %v2148
        %v2150 = vsel %vm2045, %v2108, 0.0
        %v2151 = vadd.f32 %v2149, %v2150
        %v2152 = vsel %vm2045, %v2112, 0.0
        %v2153 = vadd.f32 %v2151, %v2152
        %v2154 = vsel %vm2045, %v2116, 0.0
        %v2155 = vadd.f32 %v2153, %v2154
        %v2156 = vsel %vm2045, %v2120, 0.0
        %v2157 = vadd.f32 %v2155, %v2156
        %v2158 = vsel %vm2045, %v2124, 0.0
        %v2159 = vadd.f32 %v2157, %v2158
        %2160 = vadd.xlane.f32.xlu0 %v2159
        %v2161 = vpop.xlane.xlu0 %2160
        %v2162 = vlaneseq
        %v2163 = vand.u32 %v2162, 127
        %vm2164 = vcmp.eq.s32.totalorder %v2163, 0
        %v2165 = vsel %vm2164, %v2070, %v2161
        %vm2166 = vcmask 8192
        %2167 = vst.msk [vmem:[%s289] sm:$0x1] %vm2166, %v2165
        %s2168 = sand.u32 %s169, 1
        %s2169 = scalar_lea.sflag [#allocation3], %s2168
        %s2170 = sand.u32 %s169, 1
        %s2171 = scalar_lea.vmem [#allocation2], %s2170
        %s2172 = sand.u32 %s195, 1
        %s2173 = scalar_lea.sflag [#allocation5], %s2172
        %s2174 = sand.u32 %s195, 1
        %s2175 = smul.addr %s2174, 96
        %s2176 = scalar_lea.vmem [#allocation4], %s2175
        // Predicated region
        $region45: #{tpu_custom_call.1} parent=43 // pred_check
          %p2177 = pneg %p179
        $region46: #{tpu_custom_call.1} parent=43 // pred_check_branch
          %2179 = sbr.rel (%p2177) target = $region48
        $region47: #{tpu_custom_call.1} parent=43 // pred_region
          %s2181 = ssub.s32 16, 16
          %2182 = vsyncadd %s2169, %s2181
          %s2183 = smul.addr %s25, 16
          %s2184 = scalar_lea.hbm %s6, %s2183
          %s2186 = sshll.u32 %s2171, 4
          %s2187 = int_to_ptr.vmem [resolvable:$true] %s2186
          %2189 = dma.vmem_to_hbm [thread:$0]  %s2187, 16, %s2184, %s2169
        $region48: #{tpu_custom_call.1} parent=43 // pred_fallthru
          _
        // Predicated region
        $region49: #{tpu_custom_call.1} parent=43 // pred_check
          %p2190 = pneg %p205
        $region50: #{tpu_custom_call.1} parent=43 // pred_check_branch
          %2192 = sbr.rel (%p2190) target = $region52
        $region51: #{tpu_custom_call.1} parent=43 // pred_region
          %s2193 = smul.u32 12, %s25
          %s2195 = ssub.s32 1536, 1536
          %2196 = vsyncadd %s2173, %s2195
          %s2197 = smul.addr %s2193, 64
          %s2198 = scalar_lea.hbm %s7, %s2197
          %s2199 = sshll.u32 %s2176, 4
          %s2200 = int_to_ptr.vmem [resolvable:$true] %s2199
          %2205 = dma.vmem_to_hbm [thread:$0]  %s2200, 1536, %s2198, %s2173, 768, 1536, 48
        $region52: #{tpu_custom_call.1} parent=43 // pred_fallthru
          _
      $region44: #{tpu_custom_call.1} parent=5 // pred_fallthru
        _
      %p2206 = scmp.le.s32.totalorder 2, %s20
      // Predicated region
      $region53: #{tpu_custom_call.1} parent=5 // pred_check
        %p2207 = pneg %p2206
      $region54: #{tpu_custom_call.1} parent=5 // pred_check_branch
        %2209 = sbr.rel (%p2207) target = $region56
      $region55: #{tpu_custom_call.1} parent=5 // pred_region
        %s2210 = ssub.s32 %s20, 2
        // Predicated region
        $region57: #{tpu_custom_call.1} parent=55 // pred_check
          %p2211 = pneg %p185
        $region58: #{tpu_custom_call.1} parent=55 // pred_check_branch
          %2213 = sbr.rel (%p2211) target = $region60
        $region59: #{tpu_custom_call.1} parent=55 // pred_region
          %s2214 = sand.u32 %s170, 1
          %s2215 = scalar_lea.sflag [#allocation3], %s2214
          %s2216 = sand.u32 %s170, 1
          %s2217 = scalar_lea.vmem [#allocation2], %s2216
          %2218 = dma.done %s2215, 16
        $region60: #{tpu_custom_call.1} parent=55 // pred_fallthru
          _
        // Predicated region
        $region61: #{tpu_custom_call.1} parent=55 // pred_check
          %p2219 = pneg %p211
        $region62: #{tpu_custom_call.1} parent=55 // pred_check_branch
          %2221 = sbr.rel (%p2219) target = $region64
        $region63: #{tpu_custom_call.1} parent=55 // pred_region
          %s2222 = sand.u32 %s196, 1
          %s2223 = scalar_lea.sflag [#allocation5], %s2222
          %s2224 = sand.u32 %s196, 1
          %s2225 = smul.addr %s2224, 96
          %s2226 = scalar_lea.vmem [#allocation4], %s2225
          %2227 = dma.done %s2223, 1536
        $region64: #{tpu_custom_call.1} parent=55 // pred_fallthru
          _
      $region56: #{tpu_custom_call.1} parent=5 // pred_fallthru
        _
    $region6: #{tpu_custom_call.1} parent=1 // loop_footer
      %s24 = sadd.s32 1, %s20
    $region7: #{tpu_custom_call.1} parent=1 // loop_footer_branch
      %19 = sbr.rel target = $region3
    $region8: #{tpu_custom_call.1} parent=1 // loop_exit
      _
    %2228 = vsyncpa [#allocation3], 1
    %s2229 = scalar_lea.sflag [#allocation3], 1
    %2230 = vsyncpa %s2229, 1
    %2231 = vsyncpa [#allocation5], 1
    %s2232 = scalar_lea.sflag [#allocation5], 1
    %2233 = vsyncpa %s2232, 1

</llo_original>
